<compile_context>
chip_gen: v5e
topology: v5e:2x2
jax: 0.10.0
libtpu: 0.0.40
codegen_flags: <defaults>
</compile_context>

<pallas_src>
from functools import partial

import jax
import jax.numpy as jnp
import numpy as np
from jax import lax
from jax.experimental import pallas as pl
from jax.experimental.pallas import tpu as pltpu

DT = 0.01
THETA = 1.0


def _round_up(n, m):
    return ((n + m - 1) // m) * m


def _tpu_vmem_and_cores():
    """Generation-aware VMEM capacity (bytes) and TensorCore count, with safe fallbacks."""
    vmem = 128 * 1024 * 1024
    cores = 1
    try:
        info = pltpu.get_tpu_info()
        vmem = int(getattr(info, "vmem_capacity_bytes", vmem))
        for attr in ("num_cores", "core_count", "num_tensorcores", "tensorcores_per_chip"):
            if hasattr(info, attr):
                cores = int(getattr(info, attr))
                break
    except Exception:  # not queryable: conservative defaults (128 MiB, single TC)
        pass
    return vmem, cores


def _derive_time_block(T, BB, H_pad, O_pad, vmem_cap, max_tb=128):
    """Largest TB whose pipelined blocks + weights + scratch fit ~55% of this chip's VMEM."""
    budget = int(0.55 * vmem_cap)
    fixed = (2 * (H_pad * H_pad * 2 + H_pad * O_pad * 2            # bf16 weights (dbl-buffered)
                  + (2 * H_pad + 2 * O_pad) * 4                    # decay/domega/alpha/oma rows
                  + (3 * BB * H_pad + BB * O_pad) * 4)             # final-state / spike outputs
             + (4 * BB * H_pad + BB * O_pad) * 4)                  # z/u/v/spk + out_u carries
    per_tb = (2 * BB * H_pad * 2        # i_x bf16 block (double-buffered)
              + 2 * BB * O_pad * 4      # outs f32 block (double-buffered)
              + BB * H_pad * 4          # staged-z scratch rows
              + BB * O_pad * 4)         # staged-li scratch rows
    tb = max(1, (budget - fixed) // per_tb)
    tb = int(min(tb, T, max_tb))
    nt = -(-T // tb)
    need = fixed + per_tb * tb
    return tb, nt, need


def _preprocess(x, params, dt):
    """Shared parameter glue for kernel and reference: transpose, fold constants, hoist the
    input projection (stored bf16), pad to lane-dense tiles, quantize MXU weights to bf16."""
    T, B, I = x.shape
    w_hid = params["w_hid"].astype(jnp.float32)        # (H, I + H) torch Linear layout
    w_out = params["w_out"].astype(jnp.float32)        # (O, H)
    omega = params["omega"].astype(jnp.float32)        # (H,)
    b_off = params["b_offset"].astype(jnp.float32)     # (H,)
    tau = params["tau_mem"].astype(jnp.float32)        # (O,)
    H, O = w_hid.shape[0], w_out.shape[0]

    H_pad = _round_up(H, 128)
    O_pad = _round_up(O, 128)
    B_pad = _round_up(B, 8)

    w_in_t = jnp.transpose(w_hid[:, :I])                # (I, H)
    w_rec_t = jnp.transpose(w_hid[:, I:])               # (H, H)
    w_out_t = jnp.transpose(w_out)                      # (H, O)

    # Hoisted, dt-scaled input current: one big matmul outside the recurrence; streamed bf16.
    x_p = jnp.pad(x.astype(jnp.float32), ((0, 0), (0, B_pad - B), (0, 0)))
    i_x = dt * jnp.einsum("tbi,ih->tbh", x_p, w_in_t,
                          precision=lax.Precision.HIGHEST)           # (T, B_pad, H)
    i_x = jnp.pad(i_x, ((0, 0), (0, 0), (0, H_pad - H))).astype(jnp.bfloat16)

    # dt folded into the recurrent weight; bf16 operands for the MXU.
    wrec = jnp.pad(dt * w_rec_t, ((0, H_pad - H), (0, H_pad - H))).astype(jnp.bfloat16)
    wout = jnp.pad(w_out_t, ((0, H_pad - H), (0, O_pad - O))).astype(jnp.bfloat16)

    omega_p = jnp.pad(jnp.abs(omega), (0, H_pad - H))
    b_p = jnp.pad(-jnp.abs(b_off), (0, H_pad - H))
    decay = (1.0 + dt * b_p).reshape(1, H_pad).astype(jnp.float32)   # padded lanes -> 1.0
    domega = (dt * omega_p).reshape(1, H_pad).astype(jnp.float32)    # padded lanes -> 0.0

    alpha_v = jnp.exp(-dt / jnp.abs(tau))                             # (O,)
    alpha = jnp.pad(alpha_v, (0, O_pad - O)).reshape(1, O_pad).astype(jnp.float32)
    oma = jnp.pad(1.0 - alpha_v, (0, O_pad - O)).reshape(1, O_pad).astype(jnp.float32)

    dims = dict(T=T, B=B, I=I, H=H, O=O, B_pad=B_pad, H_pad=H_pad, O_pad=O_pad)
    return i_x, wrec, wout, decay, domega, alpha, oma, dims


def _rfrsnn_kernel(seed_ref, ix_ref, wrec_ref, wout_ref,
                   decay_ref, domega_ref, alpha_ref, oma_ref,
                   outs_ref, z_out_ref, u_out_ref, outu_out_ref, nspk_ref,
                   z_s, u_s, v_s, outu_s, spk_s, zt_s, li_s,
                   *, spike_del_p, seq_len, time_block, write_from, needs_tail):
    t_blk = pl.program_id(1)                        # time-block index (sequential axis)

    @pl.when(t_blk == 0)
    def _init():
        z_s[...] = jnp.zeros_like(z_s)
        u_s[...] = jnp.zeros_like(u_s)
        v_s[...] = jnp.zeros_like(v_s)
        outu_s[...] = jnp.zeros_like(outu_s)
        spk_s[...] = jnp.zeros_like(spk_s)
        if spike_del_p > 0.0:
            # per-batch-block stream: safe under megacore batch parallelism
            pltpu.prng_seed(seed_ref[0] + pl.program_id(0))

    tb, bb, h_pad = ix_ref.shape
    o_pad = outu_s.shape[-1]
    unroll = True if tb <= 32 else 8                # partial unroll at large TB (vreg pressure)

    decay, domega = decay_ref[...], domega_ref[...]
    alpha, oma = alpha_ref[...], oma_ref[...]
    if bb <= 32:
        # cheap at small BB; at large BB rely on implicit (1,H) broadcasting so the constants
        # are not held live as (BB,H) vregs across the whole unrolled recurrence.
        decay = jnp.broadcast_to(decay, (bb, h_pad))
        domega = jnp.broadcast_to(domega, (bb, h_pad))
        alpha = jnp.broadcast_to(alpha, (bb, o_pad))
        oma = jnp.broadcast_to(oma, (bb, o_pad))

    t0 = t_blk * time_block
    keep_thr = np.uint32(min(int(spike_del_p * (2 ** 32)), 2 ** 32 - 1))

    def step(s, carry):
        z, u, v, spk = carry
        # i_t (dt-scaled) = dt*(x_t @ W_in)  [precomputed bf16]  +  z @ (dt*W_rec).
        # W_rec is re-read from VMEM each step so it is not pinned in vregs across the unroll.
        # TODO(synk): stage W_rec in the MXU once per block (pltpu.matmul_push_rhs/acc_lhs/pop)
        #             once H_pad >= 256 to stop re-pushing the identical RHS every step.
        i_t = ix_ref[s].astype(jnp.float32) + jnp.dot(
            z.astype(jnp.bfloat16), wrec_ref[...], preferred_element_type=jnp.float32)
        u_new = decay * u - domega * v + i_t
        v_new = domega * u + decay * v
        z_new = (u_new > THETA).astype(jnp.float32)
        if spike_del_p > 0.0:
            # TODO(synk): RNG stream differs from torch.rand; iid Bernoulli-keep semantics kept.
            bits = pltpu.bitcast(pltpu.prng_random_bits(z_new.shape), jnp.uint32)
            z_new = jnp.where(bits >= keep_thr, z_new, 0.0)    # keep with prob 1 - p
        row0 = pl.multiple_of(s * bb, 8)
        zt_s[pl.ds(row0, bb), :] = z_new                       # stage spikes for block readout
        if needs_tail:
            valid = (t0 + s) < seq_len
            spk = spk + jnp.where(valid, z_new, 0.0)
            z = jnp.where(valid, z_new, z)
            u = jnp.where(valid, u_new, u)
            v = jnp.where(valid, v_new, v)
        else:
            spk = spk + z_new                                  # per-element; no XLU reduce here
            z, u, v = z_new, u_new, v_new
        return z, u, v, spk

    carry0 = (z_s[...], u_s[...], v_s[...], spk_s[...])
    z_f, u_f, v_f, spk_f = lax.fori_loop(0, tb, step, carry0, unroll=unroll)

    # One well-filled (TB*BB, H) @ (H, O) readout matmul for the whole time block — off the
    # recurrence-critical path — followed by a VPU-only leaky-integrator scan over TB.
    li_s[...] = jnp.dot(zt_s[...].astype(jnp.bfloat16), wout_ref[...],
                        preferred_element_type=jnp.float32)

    def li_step(s, ou):
        g = t0 + s
        upd = alpha * ou + oma * li_s[pl.ds(pl.multiple_of(s * bb, 8), bb), :]
        ou_new = jnp.where(g < seq_len, upd, ou) if needs_tail else upd
        if needs_tail or write_from > 0:
            cond = g >= write_from
            if needs_tail:
                cond = jnp.logical_and(cond, g < seq_len)

            @pl.when(cond)
            def _():
                outs_ref[s] = ou_new                           # only the kept time range hits HBM
        else:
            outs_ref[s] = ou_new
        return ou_new

    ou_f = lax.fori_loop(0, tb, li_step, outu_s[...], unroll=unroll)

    z_s[...] = z_f
    u_s[...] = u_f
    v_s[...] = v_f
    outu_s[...] = ou_f
    spk_s[...] = spk_f

    @pl.when(t_blk == pl.num_programs(1) - 1)
    def _final():
        z_out_ref[...] = z_f
        u_out_ref[...] = u_f
        outu_out_ref[...] = ou_f
        nspk_ref[...] = spk_f[None, :, :]                      # per-batch-block spike partials


def rfrsnn_sd_forward(x, params, *, spike_del_p=0.0, sub_seq_length=0, label_last=False,
                      dt=DT, seed=0, max_time_block=128):
    """Pallas forward of RFRSNN_SD. x: (T, B, input_size) float32."""
    i_x, wrec, wout, decay, domega, alpha, oma, d = _preprocess(x, params, dt)
    T, B, H, O = d["T"], d["B"], d["H"], d["O"]
    B_pad, H_pad, O_pad = d["B_pad"], d["H_pad"], d["O_pad"]

    vmem_cap, n_cores = _tpu_vmem_and_cores()
    # Split batch blocks only when a second TensorCore exists AND the per-block batch keeps the
    # recurrent matmul well filled; otherwise nb=2 just serializes (review: ~2x loss on v5e/v6e).
    nb = 2 if (n_cores >= 2 and B_pad % 16 == 0 and (B_pad // 2) >= 64) else 1
    BB = B_pad // nb

    TB, nt, vmem_need = _derive_time_block(T, BB, H_pad, O_pad, vmem_cap, max_tb=max_time_block)
    T_pad = nt * TB
    needs_tail = (T_pad != T)
    if needs_tail:
        i_x = jnp.pad(i_x, ((0, T_pad - T), (0, 0), (0, 0)))

    # outputs kept for t >= sub_seq_length; with label_last only the final step is needed.
    write_from = (T - 1) if label_last else int(sub_seq_length)

    kernel = partial(_rfrsnn_kernel, spike_del_p=float(spike_del_p), seq_len=T,
                     time_block=TB, write_from=write_from, needs_tail=needs_tail)
    seed_arr = jnp.array([int(seed)], dtype=jnp.int32)

    grid_spec = pltpu.PrefetchScalarGridSpec(
        num_scalar_prefetch=1,                       # seed
        grid=(nb, nt),
        in_specs=[
            pl.BlockSpec((TB, BB, H_pad), lambda b, t, *_: (t, b, 0)),   # dt * x @ W_in (bf16)
            # TODO(synk): grid-invariant operands below could use pipeline_mode=pl.Buffered(1)
            #             to reclaim VMEM once H reaches the thousands.
            pl.BlockSpec((H_pad, H_pad), lambda b, t, *_: (0, 0)),       # dt * W_rec^T (bf16)
            pl.BlockSpec((H_pad, O_pad), lambda b, t, *_: (0, 0)),       # W_out^T (bf16)
            pl.BlockSpec((1, H_pad), lambda b, t, *_: (0, 0)),           # decay = 1 + dt*b
            pl.BlockSpec((1, H_pad), lambda b, t, *_: (0, 0)),           # domega = dt*omega
            pl.BlockSpec((1, O_pad), lambda b, t, *_: (0, 0)),           # alpha
            pl.BlockSpec((1, O_pad), lambda b, t, *_: (0, 0)),           # 1 - alpha
        ],
        out_specs=[
            pl.BlockSpec((TB, BB, O_pad), lambda b, t, *_: (t, b, 0)),   # stacked out_u
            pl.BlockSpec((BB, H_pad), lambda b, t, *_: (b, 0)),          # final hidden_z
            pl.BlockSpec((BB, H_pad), lambda b, t, *_: (b, 0)),          # final hidden_u
            pl.BlockSpec((BB, O_pad), lambda b, t, *_: (b, 0)),          # final out_u
            pl.BlockSpec((1, BB, H_pad), lambda b, t, *_: (b, 0, 0)),    # spike partials
        ],
        scratch_shapes=[
            pltpu.VMEM((BB, H_pad), jnp.float32),        # z carry
            pltpu.VMEM((BB, H_pad), jnp.float32),        # u carry
            pltpu.VMEM((BB, H_pad), jnp.float32),        # v carry
            pltpu.VMEM((BB, O_pad), jnp.float32),        # out_u carry
            pltpu.VMEM((BB, H_pad), jnp.float32),        # spike-count accumulator
            pltpu.VMEM((TB * BB, H_pad), jnp.float32),   # staged spikes (block readout input)
            pltpu.VMEM((TB * BB, O_pad), jnp.float32),   # staged LI currents for the block
        ],
    )

    # Limit derived from the actual chip capacity; TB above was solved so this always fits.
    vmem_limit = int(min(max(vmem_need + (4 << 20), 32 << 20), int(0.9 * vmem_cap)))

    outs, hz, hu, ou, spk = pl.pallas_call(
        kernel,
        grid_spec=grid_spec,
        out_shape=(
            jax.ShapeDtypeStruct((T_pad, B_pad, O_pad), jnp.float32),
            jax.ShapeDtypeStruct((B_pad, H_pad), jnp.float32),
            jax.ShapeDtypeStruct((B_pad, H_pad), jnp.float32),
            jax.ShapeDtypeStruct((B_pad, O_pad), jnp.float32),
            jax.ShapeDtypeStruct((nb, BB, H_pad), jnp.float32),
        ),
        compiler_params=pltpu.CompilerParams(
            dimension_semantics=("parallel", "arbitrary"),   # batch blocks ||, time sequential
            vmem_limit_bytes=vmem_limit),
    )(seed_arr, i_x, wrec, wout, decay, domega, alpha, oma)

    outputs = outs[write_from:T, :B, :O]
    hidden_z = hz[:B, :H]
    hidden_u = hu[:B, :H]
    out_u = ou[:B, :O]
    num_spikes = jnp.sum(spk)                        # single scalar collapse, outside kernel
    return outputs, ((hidden_z, hidden_u), out_u), num_spikes


def rfrsnn_sd_reference(x, params, *, sub_seq_length=0, label_last=False, dt=DT):
    """Pure-JAX per-step reference (spike_del_p = 0).  Uses the SAME constant folding, bf16
    input-current and bf16 weight quantization as the kernel, so the comparison isolates the
    Pallas mechanics (time blocking, pipelining, state carry, tail masking, padding)."""
    i_x, wrec, wout, decay, domega, alpha, oma, d = _preprocess(x, params, dt)
    B, H, O = d["B"], d["H"], d["O"]
    B_pad, H_pad, O_pad = d["B_pad"], d["H_pad"], d["O_pad"]

    def step(carry, ix_t):
        z, u, v, ou, ns = carry
        i_t = ix_t.astype(jnp.float32) + jnp.dot(z.astype(jnp.bfloat16), wrec,
                                                 preferred_element_type=jnp.float32)
        u_new = decay * u - domega * v + i_t
        v_new = domega * u + decay * v
        z_new = (u_new > THETA).astype(jnp.float32)
        ns = ns + jnp.sum(z_new)
        ou_new = alpha * ou + oma * jnp.dot(z_new.astype(jnp.bfloat16), wout,
                                            preferred_element_type=jnp.float32)
        return (z_new, u_new, v_new, ou_new, ns), ou_new

    init = (jnp.zeros((B_pad, H_pad), jnp.float32),
            jnp.zeros((B_pad, H_pad), jnp.float32),
            jnp.zeros((B_pad, H_pad), jnp.float32),
            jnp.zeros((B_pad, O_pad), jnp.float32),
            jnp.float32(0.0))
    (z, u, _, ou, ns), outs = lax.scan(step, init, i_x)
    outputs = outs[:, :B, :O]
    outputs = outputs[sub_seq_length:]
    if label_last:
        outputs = outputs[-1:]
    return outputs, ((z[:B, :H], u[:B, :H]), ou[:B, :O]), ns


if __name__ == "__main__":
    # small shapes consistent with the module: seq=8, batch=2, input=16, hidden=32, out=4
    T, B, I, H, O = 8, 2, 16, 32, 4
    key = jax.random.PRNGKey(0)
    k_x, k_wh, k_wo, k_om, k_bo, k_tau = jax.random.split(key, 6)

    # deterministic parameter init (mirrors the module's __init__ distributions)
    fan_hid = I + H
    params = {
        "w_hid": jax.random.uniform(k_wh, (H, I + H), jnp.float32,
                                    -1.0 / np.sqrt(fan_hid), 1.0 / np.sqrt(fan_hid)),
        "w_out": jax.random.uniform(k_wo, (O, H), jnp.float32,
                                    -1.0 / np.sqrt(H), 1.0 / np.sqrt(H)),
        "omega": jax.random.uniform(k_om, (H,), jnp.float32, 5.0, 10.0),
        "b_offset": jax.random.uniform(k_bo, (H,), jnp.float32, 0.0, 1.0),
        "tau_mem": 20.0 + 5.0 * jax.random.normal(k_tau, (O,), jnp.float32),
    }
    # scale inputs so the resonate-and-fire units actually emit spikes at dt=0.01
    x = 100.0 * jax.random.normal(k_x, (T, B, I), jnp.float32)

    # 1) default config
    outputs, ((hz, hu), out_u), num_spikes = rfrsnn_sd_forward(
        x, params, spike_del_p=0.0, sub_seq_length=0, label_last=False, seed=0)
    jax.block_until_ready((outputs, hz, hu, out_u, num_spikes))
    r_out, ((r_z, r_u), r_ou), r_ns = rfrsnn_sd_reference(x, params)
    np.testing.assert_allclose(np.asarray(outputs), np.asarray(r_out), rtol=1e-3, atol=1e-3)
    np.testing.assert_allclose(np.asarray(hz), np.asarray(r_z), rtol=1e-3, atol=1e-3)
    np.testing.assert_allclose(np.asarray(hu), np.asarray(r_u), rtol=1e-3, atol=1e-3)
    np.testing.assert_allclose(np.asarray(out_u), np.asarray(r_ou), rtol=1e-3, atol=1e-3)
    np.testing.assert_allclose(float(num_spikes), float(r_ns), rtol=1e-3, atol=1e-3)

    # 2) sub_seq_length > 0 (exercises the gated outs writeback)
    outputs2, _, _ = rfrsnn_sd_forward(x, params, sub_seq_length=3)
    r_out2, _, _ = rfrsnn_sd_reference(x, params, sub_seq_length=3)
    np.testing.assert_allclose(np.asarray(outputs2), np.asarray(r_out2), rtol=1e-3, atol=1e-3)

    # 3) label_last + a time block that does not divide T (exercises the masked tail block)
    outputs3, ((hz3, hu3), ou3), ns3 = rfrsnn_sd_forward(
        x, params, label_last=True, max_time_block=3)
    r_out3, ((r_z3, r_u3), r_ou3), r_ns3 = rfrsnn_sd_reference(x, params, label_last=True)
    np.testing.assert_allclose(np.asarray(outputs3), np.asarray(r_out3), rtol=1e-3, atol=1e-3)
    np.testing.assert_allclose(np.asarray(hz3), np.asarray(r_z3), rtol=1e-3, atol=1e-3)
    np.testing.assert_allclose(np.asarray(hu3), np.asarray(r_u3), rtol=1e-3, atol=1e-3)
    np.testing.assert_allclose(np.asarray(ou3), np.asarray(r_ou3), rtol=1e-3, atol=1e-3)
    np.testing.assert_allclose(float(ns3), float(r_ns3), rtol=1e-3, atol=1e-3)

    print("KERNEL_OK")
</pallas_src>

<mosaic_0001>
module attributes {stable_mosaic.version = 11 : i64} {
  func.func @_rfrsnn_kernel(%arg0: i32, %arg1: i32, %arg2: memref<1xi32, #tpu.memory_space<smem>>, %arg3: memref<8x8x128xbf16, #tpu.memory_space<vmem>>, %arg4: memref<128x128xbf16, #tpu.memory_space<vmem>>, %arg5: memref<128x128xbf16, #tpu.memory_space<vmem>>, %arg6: memref<1x128xf32, #tpu.memory_space<vmem>>, %arg7: memref<1x128xf32, #tpu.memory_space<vmem>>, %arg8: memref<1x128xf32, #tpu.memory_space<vmem>>, %arg9: memref<1x128xf32, #tpu.memory_space<vmem>>, %arg10: memref<8x8x128xf32, #tpu.memory_space<vmem>>, %arg11: memref<8x128xf32, #tpu.memory_space<vmem>>, %arg12: memref<8x128xf32, #tpu.memory_space<vmem>>, %arg13: memref<8x128xf32, #tpu.memory_space<vmem>>, %arg14: memref<1x8x128xf32, #tpu.memory_space<vmem>>, %arg15: memref<8x128xf32, #tpu.memory_space<vmem>>, %arg16: memref<8x128xf32, #tpu.memory_space<vmem>>, %arg17: memref<8x128xf32, #tpu.memory_space<vmem>>, %arg18: memref<8x128xf32, #tpu.memory_space<vmem>>, %arg19: memref<8x128xf32, #tpu.memory_space<vmem>>, %arg20: memref<64x128xf32, #tpu.memory_space<vmem>>, %arg21: memref<64x128xf32, #tpu.memory_space<vmem>>) attributes {dimension_semantics = [#tpu.dimension_semantics<parallel>, #tpu.dimension_semantics<arbitrary>], iteration_bounds = array<i64: 1, 1>, scalar_prefetch = 1 : i64, scratch_operands = 7 : i64, tpu.core_type = #tpu.core_type<tc>, window_params = [{transform_indices = @transform_0, window_bounds = array<i64: 8, 8, 128>}, {pipeline_mode = #tpu.pipeline_mode<synchronous>, transform_indices = @transform_1, window_bounds = array<i64: 128, 128>}, {pipeline_mode = #tpu.pipeline_mode<synchronous>, transform_indices = @transform_2, window_bounds = array<i64: 128, 128>}, {pipeline_mode = #tpu.pipeline_mode<synchronous>, transform_indices = @transform_3, window_bounds = array<i64: 1, 128>}, {pipeline_mode = #tpu.pipeline_mode<synchronous>, transform_indices = @transform_4, window_bounds = array<i64: 1, 128>}, {pipeline_mode = #tpu.pipeline_mode<synchronous>, transform_indices = @transform_5, window_bounds = array<i64: 1, 128>}, {pipeline_mode = #tpu.pipeline_mode<synchronous>, transform_indices = @transform_6, window_bounds = array<i64: 1, 128>}, {transform_indices = @transform_7, window_bounds = array<i64: 8, 8, 128>}, {transform_indices = @transform_8, window_bounds = array<i64: 8, 128>}, {transform_indices = @transform_9, window_bounds = array<i64: 8, 128>}, {transform_indices = @transform_10, window_bounds = array<i64: 8, 128>}, {transform_indices = @transform_11, window_bounds = array<i64: 1, 8, 128>}]} {
    %c0_i32 = arith.constant 0 : i32
    %0 = arith.cmpi eq, %arg1, %c0_i32 : i32
    %1 = arith.extui %0 : i1 to i32
    %c0_i32_0 = arith.constant 0 : i32
    %2 = arith.cmpi ne, %1, %c0_i32_0 : i32
    scf.if %2 {
      %cst_142 = arith.constant 0.000000e+00 : f32
      %313 = vector.broadcast %cst_142 : f32 to vector<8x128xf32>
      %c0_143 = arith.constant 0 : index
      %c0_144 = arith.constant 0 : index
      %314 = vector.load %arg15[%c0_143, %c0_144] : memref<8x128xf32, #tpu.memory_space<vmem>>, vector<8x128xf32>
      tpu.vector_store %arg15[%c0_143, %c0_144], %313 {strides = array<i32>} : memref<8x128xf32, #tpu.memory_space<vmem>>, vector<8x128xf32>,
      %cst_145 = arith.constant 0.000000e+00 : f32
      %315 = vector.broadcast %cst_145 : f32 to vector<8x128xf32>
      %c0_146 = arith.constant 0 : index
      %c0_147 = arith.constant 0 : index
      %316 = vector.load %arg16[%c0_146, %c0_147] : memref<8x128xf32, #tpu.memory_space<vmem>>, vector<8x128xf32>
      tpu.vector_store %arg16[%c0_146, %c0_147], %315 {strides = array<i32>} : memref<8x128xf32, #tpu.memory_space<vmem>>, vector<8x128xf32>,
      %cst_148 = arith.constant 0.000000e+00 : f32
      %317 = vector.broadcast %cst_148 : f32 to vector<8x128xf32>
      %c0_149 = arith.constant 0 : index
      %c0_150 = arith.constant 0 : index
      %318 = vector.load %arg17[%c0_149, %c0_150] : memref<8x128xf32, #tpu.memory_space<vmem>>, vector<8x128xf32>
      tpu.vector_store %arg17[%c0_149, %c0_150], %317 {strides = array<i32>} : memref<8x128xf32, #tpu.memory_space<vmem>>, vector<8x128xf32>,
      %cst_151 = arith.constant 0.000000e+00 : f32
      %319 = vector.broadcast %cst_151 : f32 to vector<8x128xf32>
      %c0_152 = arith.constant 0 : index
      %c0_153 = arith.constant 0 : index
      %320 = vector.load %arg18[%c0_152, %c0_153] : memref<8x128xf32, #tpu.memory_space<vmem>>, vector<8x128xf32>
      tpu.vector_store %arg18[%c0_152, %c0_153], %319 {strides = array<i32>} : memref<8x128xf32, #tpu.memory_space<vmem>>, vector<8x128xf32>,
      %cst_154 = arith.constant 0.000000e+00 : f32
      %321 = vector.broadcast %cst_154 : f32 to vector<8x128xf32>
      %c0_155 = arith.constant 0 : index
      %c0_156 = arith.constant 0 : index
      %322 = vector.load %arg19[%c0_155, %c0_156] : memref<8x128xf32, #tpu.memory_space<vmem>>, vector<8x128xf32>
      tpu.vector_store %arg19[%c0_155, %c0_156], %321 {strides = array<i32>} : memref<8x128xf32, #tpu.memory_space<vmem>>, vector<8x128xf32>,
    } else {
    }
    %c0 = arith.constant 0 : index
    %c0_1 = arith.constant 0 : index
    %3 = vector.load %arg6[%c0, %c0_1] : memref<1x128xf32, #tpu.memory_space<vmem>>, vector<1x128xf32>
    %c0_2 = arith.constant 0 : index
    %c0_3 = arith.constant 0 : index
    %4 = vector.load %arg7[%c0_2, %c0_3] : memref<1x128xf32, #tpu.memory_space<vmem>>, vector<1x128xf32>
    %c0_4 = arith.constant 0 : index
    %c0_5 = arith.constant 0 : index
    %5 = vector.load %arg8[%c0_4, %c0_5] : memref<1x128xf32, #tpu.memory_space<vmem>>, vector<1x128xf32>
    %c0_6 = arith.constant 0 : index
    %c0_7 = arith.constant 0 : index
    %6 = vector.load %arg9[%c0_6, %c0_7] : memref<1x128xf32, #tpu.memory_space<vmem>>, vector<1x128xf32>
    %7 = vector.shape_cast %3 : vector<1x128xf32> to vector<1x128xf32>
    %8 = vector.broadcast %7 : vector<1x128xf32> to vector<8x128xf32>
    %9 = vector.shape_cast %4 : vector<1x128xf32> to vector<1x128xf32>
    %10 = vector.broadcast %9 : vector<1x128xf32> to vector<8x128xf32>
    %11 = vector.shape_cast %5 : vector<1x128xf32> to vector<1x128xf32>
    %12 = vector.broadcast %11 : vector<1x128xf32> to vector<8x128xf32>
    %13 = vector.shape_cast %6 : vector<1x128xf32> to vector<1x128xf32>
    %14 = vector.broadcast %13 : vector<1x128xf32> to vector<8x128xf32>
    %c0_8 = arith.constant 0 : index
    %c0_9 = arith.constant 0 : index
    %15 = vector.load %arg15[%c0_8, %c0_9] : memref<8x128xf32, #tpu.memory_space<vmem>>, vector<8x128xf32>
    %c0_10 = arith.constant 0 : index
    %c0_11 = arith.constant 0 : index
    %16 = vector.load %arg16[%c0_10, %c0_11] : memref<8x128xf32, #tpu.memory_space<vmem>>, vector<8x128xf32>
    %c0_12 = arith.constant 0 : index
    %c0_13 = arith.constant 0 : index
    %17 = vector.load %arg17[%c0_12, %c0_13] : memref<8x128xf32, #tpu.memory_space<vmem>>, vector<8x128xf32>
    %c0_14 = arith.constant 0 : index
    %c0_15 = arith.constant 0 : index
    %18 = vector.load %arg19[%c0_14, %c0_15] : memref<8x128xf32, #tpu.memory_space<vmem>>, vector<8x128xf32>
    %c0_i32_16 = arith.constant 0 : i32
    %19 = arith.index_cast %c0_i32_16 : i32 to index
    %c0_17 = arith.constant 0 : index
    %c0_18 = arith.constant 0 : index
    %20 = vector.load %arg3[%19, %c0_17, %c0_18] : memref<8x8x128xbf16, #tpu.memory_space<vmem>>, vector<1x8x128xbf16>
    %21 = vector.shape_cast %20 : vector<1x8x128xbf16> to vector<8x128xbf16>
    %22 = arith.extf %21 : vector<8x128xbf16> to vector<8x128xf32>
    %23 = arith.truncf %15 : vector<8x128xf32> to vector<8x128xbf16>
    %c0_19 = arith.constant 0 : index
    %c0_20 = arith.constant 0 : index
    %24 = vector.load %arg4[%c0_19, %c0_20] : memref<128x128xbf16, #tpu.memory_space<vmem>>, vector<128x128xbf16>
    %cst = arith.constant dense<0.000000e+00> : vector<8x128xf32>
    %25 = tpu.matmul %23, %24, %cst {dimension_numbers = #tpu.dot_dimension_numbers<[1], [0], [0], [1], [0, 0, 1, 1], [], []>} : vector<8x128xbf16>, vector<128x128xbf16>, vector<8x128xf32> -> vector<8x128xf32>
    %26 = arith.addf %22, %25 : vector<8x128xf32>
    %27 = arith.mulf %8, %16 : vector<8x128xf32>
    %28 = arith.mulf %10, %17 : vector<8x128xf32>
    %29 = arith.subf %27, %28 : vector<8x128xf32>
    %30 = arith.addf %29, %26 : vector<8x128xf32>
    %31 = arith.mulf %10, %16 : vector<8x128xf32>
    %32 = arith.mulf %8, %17 : vector<8x128xf32>
    %33 = arith.addf %31, %32 : vector<8x128xf32>
    %cst_21 = arith.constant 1.000000e+00 : f32
    %34 = vector.broadcast %cst_21 : f32 to vector<8x128xf32>
    %35 = arith.cmpf ogt, %30, %34 : vector<8x128xf32>
    %36 = arith.extui %35 : vector<8x128xi1> to vector<8x128xi32>
    %37 = arith.sitofp %36 : vector<8x128xi32> to vector<8x128xf32>
    %c8_i32 = arith.constant 8 : i32
    %38 = arith.muli %c0_i32_16, %c8_i32 : i32
    %39 = tpu.assume_multiple %38, 8 : i32
    %40 = arith.index_cast %39 : i32 to index
    %c0_22 = arith.constant 0 : index
    %41 = vector.load %arg20[%40, %c0_22] : memref<64x128xf32, #tpu.memory_space<vmem>>, vector<8x128xf32>
    tpu.vector_store %arg20[%40, %c0_22], %37 {strides = array<i32>} : memref<64x128xf32, #tpu.memory_space<vmem>>, vector<8x128xf32>,
    %42 = arith.addf %18, %37 : vector<8x128xf32>
    %c1_i32 = arith.constant 1 : i32
    %43 = arith.index_cast %c1_i32 : i32 to index
    %c0_23 = arith.constant 0 : index
    %c0_24 = arith.constant 0 : index
    %44 = vector.load %arg3[%43, %c0_23, %c0_24] : memref<8x8x128xbf16, #tpu.memory_space<vmem>>, vector<1x8x128xbf16>
    %45 = vector.shape_cast %44 : vector<1x8x128xbf16> to vector<8x128xbf16>
    %46 = arith.extf %45 : vector<8x128xbf16> to vector<8x128xf32>
    %47 = arith.truncf %37 : vector<8x128xf32> to vector<8x128xbf16>
    %c0_25 = arith.constant 0 : index
    %c0_26 = arith.constant 0 : index
    %48 = vector.load %arg4[%c0_25, %c0_26] : memref<128x128xbf16, #tpu.memory_space<vmem>>, vector<128x128xbf16>
    %cst_27 = arith.constant dense<0.000000e+00> : vector<8x128xf32>
    %49 = tpu.matmul %47, %48, %cst_27 {dimension_numbers = #tpu.dot_dimension_numbers<[1], [0], [0], [1], [0, 0, 1, 1], [], []>} : vector<8x128xbf16>, vector<128x128xbf16>, vector<8x128xf32> -> vector<8x128xf32>
    %50 = arith.addf %46, %49 : vector<8x128xf32>
    %51 = arith.mulf %8, %30 : vector<8x128xf32>
    %52 = arith.mulf %10, %33 : vector<8x128xf32>
    %53 = arith.subf %51, %52 : vector<8x128xf32>
    %54 = arith.addf %53, %50 : vector<8x128xf32>
    %55 = arith.mulf %10, %30 : vector<8x128xf32>
    %56 = arith.mulf %8, %33 : vector<8x128xf32>
    %57 = arith.addf %55, %56 : vector<8x128xf32>
    %cst_28 = arith.constant 1.000000e+00 : f32
    %58 = vector.broadcast %cst_28 : f32 to vector<8x128xf32>
    %59 = arith.cmpf ogt, %54, %58 : vector<8x128xf32>
    %60 = arith.extui %59 : vector<8x128xi1> to vector<8x128xi32>
    %61 = arith.sitofp %60 : vector<8x128xi32> to vector<8x128xf32>
    %c8_i32_29 = arith.constant 8 : i32
    %62 = arith.muli %c1_i32, %c8_i32_29 : i32
    %63 = tpu.assume_multiple %62, 8 : i32
    %64 = arith.index_cast %63 : i32 to index
    %c0_30 = arith.constant 0 : index
    %65 = vector.load %arg20[%64, %c0_30] : memref<64x128xf32, #tpu.memory_space<vmem>>, vector<8x128xf32>
    tpu.vector_store %arg20[%64, %c0_30], %61 {strides = array<i32>} : memref<64x128xf32, #tpu.memory_space<vmem>>, vector<8x128xf32>,
    %66 = arith.addf %42, %61 : vector<8x128xf32>
    %c2_i32 = arith.constant 2 : i32
    %67 = arith.index_cast %c2_i32 : i32 to index
    %c0_31 = arith.constant 0 : index
    %c0_32 = arith.constant 0 : index
    %68 = vector.load %arg3[%67, %c0_31, %c0_32] : memref<8x8x128xbf16, #tpu.memory_space<vmem>>, vector<1x8x128xbf16>
    %69 = vector.shape_cast %68 : vector<1x8x128xbf16> to vector<8x128xbf16>
    %70 = arith.extf %69 : vector<8x128xbf16> to vector<8x128xf32>
    %71 = arith.truncf %61 : vector<8x128xf32> to vector<8x128xbf16>
    %c0_33 = arith.constant 0 : index
    %c0_34 = arith.constant 0 : index
    %72 = vector.load %arg4[%c0_33, %c0_34] : memref<128x128xbf16, #tpu.memory_space<vmem>>, vector<128x128xbf16>
    %cst_35 = arith.constant dense<0.000000e+00> : vector<8x128xf32>
    %73 = tpu.matmul %71, %72, %cst_35 {dimension_numbers = #tpu.dot_dimension_numbers<[1], [0], [0], [1], [0, 0, 1, 1], [], []>} : vector<8x128xbf16>, vector<128x128xbf16>, vector<8x128xf32> -> vector<8x128xf32>
    %74 = arith.addf %70, %73 : vector<8x128xf32>
    %75 = arith.mulf %8, %54 : vector<8x128xf32>
    %76 = arith.mulf %10, %57 : vector<8x128xf32>
    %77 = arith.subf %75, %76 : vector<8x128xf32>
    %78 = arith.addf %77, %74 : vector<8x128xf32>
    %79 = arith.mulf %10, %54 : vector<8x128xf32>
    %80 = arith.mulf %8, %57 : vector<8x128xf32>
    %81 = arith.addf %79, %80 : vector<8x128xf32>
    %cst_36 = arith.constant 1.000000e+00 : f32
    %82 = vector.broadcast %cst_36 : f32 to vector<8x128xf32>
    %83 = arith.cmpf ogt, %78, %82 : vector<8x128xf32>
    %84 = arith.extui %83 : vector<8x128xi1> to vector<8x128xi32>
    %85 = arith.sitofp %84 : vector<8x128xi32> to vector<8x128xf32>
    %c8_i32_37 = arith.constant 8 : i32
    %86 = arith.muli %c2_i32, %c8_i32_37 : i32
    %87 = tpu.assume_multiple %86, 8 : i32
    %88 = arith.index_cast %87 : i32 to index
    %c0_38 = arith.constant 0 : index
    %89 = vector.load %arg20[%88, %c0_38] : memref<64x128xf32, #tpu.memory_space<vmem>>, vector<8x128xf32>
    tpu.vector_store %arg20[%88, %c0_38], %85 {strides = array<i32>} : memref<64x128xf32, #tpu.memory_space<vmem>>, vector<8x128xf32>,
    %90 = arith.addf %66, %85 : vector<8x128xf32>
    %c3_i32 = arith.constant 3 : i32
    %91 = arith.index_cast %c3_i32 : i32 to index
    %c0_39 = arith.constant 0 : index
    %c0_40 = arith.constant 0 : index
    %92 = vector.load %arg3[%91, %c0_39, %c0_40] : memref<8x8x128xbf16, #tpu.memory_space<vmem>>, vector<1x8x128xbf16>
    %93 = vector.shape_cast %92 : vector<1x8x128xbf16> to vector<8x128xbf16>
    %94 = arith.extf %93 : vector<8x128xbf16> to vector<8x128xf32>
    %95 = arith.truncf %85 : vector<8x128xf32> to vector<8x128xbf16>
    %c0_41 = arith.constant 0 : index
    %c0_42 = arith.constant 0 : index
    %96 = vector.load %arg4[%c0_41, %c0_42] : memref<128x128xbf16, #tpu.memory_space<vmem>>, vector<128x128xbf16>
    %cst_43 = arith.constant dense<0.000000e+00> : vector<8x128xf32>
    %97 = tpu.matmul %95, %96, %cst_43 {dimension_numbers = #tpu.dot_dimension_numbers<[1], [0], [0], [1], [0, 0, 1, 1], [], []>} : vector<8x128xbf16>, vector<128x128xbf16>, vector<8x128xf32> -> vector<8x128xf32>
    %98 = arith.addf %94, %97 : vector<8x128xf32>
    %99 = arith.mulf %8, %78 : vector<8x128xf32>
    %100 = arith.mulf %10, %81 : vector<8x128xf32>
    %101 = arith.subf %99, %100 : vector<8x128xf32>
    %102 = arith.addf %101, %98 : vector<8x128xf32>
    %103 = arith.mulf %10, %78 : vector<8x128xf32>
    %104 = arith.mulf %8, %81 : vector<8x128xf32>
    %105 = arith.addf %103, %104 : vector<8x128xf32>
    %cst_44 = arith.constant 1.000000e+00 : f32
    %106 = vector.broadcast %cst_44 : f32 to vector<8x128xf32>
    %107 = arith.cmpf ogt, %102, %106 : vector<8x128xf32>
    %108 = arith.extui %107 : vector<8x128xi1> to vector<8x128xi32>
    %109 = arith.sitofp %108 : vector<8x128xi32> to vector<8x128xf32>
    %c8_i32_45 = arith.constant 8 : i32
    %110 = arith.muli %c3_i32, %c8_i32_45 : i32
    %111 = tpu.assume_multiple %110, 8 : i32
    %112 = arith.index_cast %111 : i32 to index
    %c0_46 = arith.constant 0 : index
    %113 = vector.load %arg20[%112, %c0_46] : memref<64x128xf32, #tpu.memory_space<vmem>>, vector<8x128xf32>
    tpu.vector_store %arg20[%112, %c0_46], %109 {strides = array<i32>} : memref<64x128xf32, #tpu.memory_space<vmem>>, vector<8x128xf32>,
    %114 = arith.addf %90, %109 : vector<8x128xf32>
    %c4_i32 = arith.constant 4 : i32
    %115 = arith.index_cast %c4_i32 : i32 to index
    %c0_47 = arith.constant 0 : index
    %c0_48 = arith.constant 0 : index
    %116 = vector.load %arg3[%115, %c0_47, %c0_48] : memref<8x8x128xbf16, #tpu.memory_space<vmem>>, vector<1x8x128xbf16>
    %117 = vector.shape_cast %116 : vector<1x8x128xbf16> to vector<8x128xbf16>
    %118 = arith.extf %117 : vector<8x128xbf16> to vector<8x128xf32>
    %119 = arith.truncf %109 : vector<8x128xf32> to vector<8x128xbf16>
    %c0_49 = arith.constant 0 : index
    %c0_50 = arith.constant 0 : index
    %120 = vector.load %arg4[%c0_49, %c0_50] : memref<128x128xbf16, #tpu.memory_space<vmem>>, vector<128x128xbf16>
    %cst_51 = arith.constant dense<0.000000e+00> : vector<8x128xf32>
    %121 = tpu.matmul %119, %120, %cst_51 {dimension_numbers = #tpu.dot_dimension_numbers<[1], [0], [0], [1], [0, 0, 1, 1], [], []>} : vector<8x128xbf16>, vector<128x128xbf16>, vector<8x128xf32> -> vector<8x128xf32>
    %122 = arith.addf %118, %121 : vector<8x128xf32>
    %123 = arith.mulf %8, %102 : vector<8x128xf32>
    %124 = arith.mulf %10, %105 : vector<8x128xf32>
    %125 = arith.subf %123, %124 : vector<8x128xf32>
    %126 = arith.addf %125, %122 : vector<8x128xf32>
    %127 = arith.mulf %10, %102 : vector<8x128xf32>
    %128 = arith.mulf %8, %105 : vector<8x128xf32>
    %129 = arith.addf %127, %128 : vector<8x128xf32>
    %cst_52 = arith.constant 1.000000e+00 : f32
    %130 = vector.broadcast %cst_52 : f32 to vector<8x128xf32>
    %131 = arith.cmpf ogt, %126, %130 : vector<8x128xf32>
    %132 = arith.extui %131 : vector<8x128xi1> to vector<8x128xi32>
    %133 = arith.sitofp %132 : vector<8x128xi32> to vector<8x128xf32>
    %c8_i32_53 = arith.constant 8 : i32
    %134 = arith.muli %c4_i32, %c8_i32_53 : i32
    %135 = tpu.assume_multiple %134, 8 : i32
    %136 = arith.index_cast %135 : i32 to index
    %c0_54 = arith.constant 0 : index
    %137 = vector.load %arg20[%136, %c0_54] : memref<64x128xf32, #tpu.memory_space<vmem>>, vector<8x128xf32>
    tpu.vector_store %arg20[%136, %c0_54], %133 {strides = array<i32>} : memref<64x128xf32, #tpu.memory_space<vmem>>, vector<8x128xf32>,
    %138 = arith.addf %114, %133 : vector<8x128xf32>
    %c5_i32 = arith.constant 5 : i32
    %139 = arith.index_cast %c5_i32 : i32 to index
    %c0_55 = arith.constant 0 : index
    %c0_56 = arith.constant 0 : index
    %140 = vector.load %arg3[%139, %c0_55, %c0_56] : memref<8x8x128xbf16, #tpu.memory_space<vmem>>, vector<1x8x128xbf16>
    %141 = vector.shape_cast %140 : vector<1x8x128xbf16> to vector<8x128xbf16>
    %142 = arith.extf %141 : vector<8x128xbf16> to vector<8x128xf32>
    %143 = arith.truncf %133 : vector<8x128xf32> to vector<8x128xbf16>
    %c0_57 = arith.constant 0 : index
    %c0_58 = arith.constant 0 : index
    %144 = vector.load %arg4[%c0_57, %c0_58] : memref<128x128xbf16, #tpu.memory_space<vmem>>, vector<128x128xbf16>
    %cst_59 = arith.constant dense<0.000000e+00> : vector<8x128xf32>
    %145 = tpu.matmul %143, %144, %cst_59 {dimension_numbers = #tpu.dot_dimension_numbers<[1], [0], [0], [1], [0, 0, 1, 1], [], []>} : vector<8x128xbf16>, vector<128x128xbf16>, vector<8x128xf32> -> vector<8x128xf32>
    %146 = arith.addf %142, %145 : vector<8x128xf32>
    %147 = arith.mulf %8, %126 : vector<8x128xf32>
    %148 = arith.mulf %10, %129 : vector<8x128xf32>
    %149 = arith.subf %147, %148 : vector<8x128xf32>
    %150 = arith.addf %149, %146 : vector<8x128xf32>
    %151 = arith.mulf %10, %126 : vector<8x128xf32>
    %152 = arith.mulf %8, %129 : vector<8x128xf32>
    %153 = arith.addf %151, %152 : vector<8x128xf32>
    %cst_60 = arith.constant 1.000000e+00 : f32
    %154 = vector.broadcast %cst_60 : f32 to vector<8x128xf32>
    %155 = arith.cmpf ogt, %150, %154 : vector<8x128xf32>
    %156 = arith.extui %155 : vector<8x128xi1> to vector<8x128xi32>
    %157 = arith.sitofp %156 : vector<8x128xi32> to vector<8x128xf32>
    %c8_i32_61 = arith.constant 8 : i32
    %158 = arith.muli %c5_i32, %c8_i32_61 : i32
    %159 = tpu.assume_multiple %158, 8 : i32
    %160 = arith.index_cast %159 : i32 to index
    %c0_62 = arith.constant 0 : index
    %161 = vector.load %arg20[%160, %c0_62] : memref<64x128xf32, #tpu.memory_space<vmem>>, vector<8x128xf32>
    tpu.vector_store %arg20[%160, %c0_62], %157 {strides = array<i32>} : memref<64x128xf32, #tpu.memory_space<vmem>>, vector<8x128xf32>,
    %162 = arith.addf %138, %157 : vector<8x128xf32>
    %c6_i32 = arith.constant 6 : i32
    %163 = arith.index_cast %c6_i32 : i32 to index
    %c0_63 = arith.constant 0 : index
    %c0_64 = arith.constant 0 : index
    %164 = vector.load %arg3[%163, %c0_63, %c0_64] : memref<8x8x128xbf16, #tpu.memory_space<vmem>>, vector<1x8x128xbf16>
    %165 = vector.shape_cast %164 : vector<1x8x128xbf16> to vector<8x128xbf16>
    %166 = arith.extf %165 : vector<8x128xbf16> to vector<8x128xf32>
    %167 = arith.truncf %157 : vector<8x128xf32> to vector<8x128xbf16>
    %c0_65 = arith.constant 0 : index
    %c0_66 = arith.constant 0 : index
    %168 = vector.load %arg4[%c0_65, %c0_66] : memref<128x128xbf16, #tpu.memory_space<vmem>>, vector<128x128xbf16>
    %cst_67 = arith.constant dense<0.000000e+00> : vector<8x128xf32>
    %169 = tpu.matmul %167, %168, %cst_67 {dimension_numbers = #tpu.dot_dimension_numbers<[1], [0], [0], [1], [0, 0, 1, 1], [], []>} : vector<8x128xbf16>, vector<128x128xbf16>, vector<8x128xf32> -> vector<8x128xf32>
    %170 = arith.addf %166, %169 : vector<8x128xf32>
    %171 = arith.mulf %8, %150 : vector<8x128xf32>
    %172 = arith.mulf %10, %153 : vector<8x128xf32>
    %173 = arith.subf %171, %172 : vector<8x128xf32>
    %174 = arith.addf %173, %170 : vector<8x128xf32>
    %175 = arith.mulf %10, %150 : vector<8x128xf32>
    %176 = arith.mulf %8, %153 : vector<8x128xf32>
    %177 = arith.addf %175, %176 : vector<8x128xf32>
    %cst_68 = arith.constant 1.000000e+00 : f32
    %178 = vector.broadcast %cst_68 : f32 to vector<8x128xf32>
    %179 = arith.cmpf ogt, %174, %178 : vector<8x128xf32>
    %180 = arith.extui %179 : vector<8x128xi1> to vector<8x128xi32>
    %181 = arith.sitofp %180 : vector<8x128xi32> to vector<8x128xf32>
    %c8_i32_69 = arith.constant 8 : i32
    %182 = arith.muli %c6_i32, %c8_i32_69 : i32
    %183 = tpu.assume_multiple %182, 8 : i32
    %184 = arith.index_cast %183 : i32 to index
    %c0_70 = arith.constant 0 : index
    %185 = vector.load %arg20[%184, %c0_70] : memref<64x128xf32, #tpu.memory_space<vmem>>, vector<8x128xf32>
    tpu.vector_store %arg20[%184, %c0_70], %181 {strides = array<i32>} : memref<64x128xf32, #tpu.memory_space<vmem>>, vector<8x128xf32>,
    %186 = arith.addf %162, %181 : vector<8x128xf32>
    %c7_i32 = arith.constant 7 : i32
    %187 = arith.index_cast %c7_i32 : i32 to index
    %c0_71 = arith.constant 0 : index
    %c0_72 = arith.constant 0 : index
    %188 = vector.load %arg3[%187, %c0_71, %c0_72] : memref<8x8x128xbf16, #tpu.memory_space<vmem>>, vector<1x8x128xbf16>
    %189 = vector.shape_cast %188 : vector<1x8x128xbf16> to vector<8x128xbf16>
    %190 = arith.extf %189 : vector<8x128xbf16> to vector<8x128xf32>
    %191 = arith.truncf %181 : vector<8x128xf32> to vector<8x128xbf16>
    %c0_73 = arith.constant 0 : index
    %c0_74 = arith.constant 0 : index
    %192 = vector.load %arg4[%c0_73, %c0_74] : memref<128x128xbf16, #tpu.memory_space<vmem>>, vector<128x128xbf16>
    %cst_75 = arith.constant dense<0.000000e+00> : vector<8x128xf32>
    %193 = tpu.matmul %191, %192, %cst_75 {dimension_numbers = #tpu.dot_dimension_numbers<[1], [0], [0], [1], [0, 0, 1, 1], [], []>} : vector<8x128xbf16>, vector<128x128xbf16>, vector<8x128xf32> -> vector<8x128xf32>
    %194 = arith.addf %190, %193 : vector<8x128xf32>
    %195 = arith.mulf %8, %174 : vector<8x128xf32>
    %196 = arith.mulf %10, %177 : vector<8x128xf32>
    %197 = arith.subf %195, %196 : vector<8x128xf32>
    %198 = arith.addf %197, %194 : vector<8x128xf32>
    %199 = arith.mulf %10, %174 : vector<8x128xf32>
    %200 = arith.mulf %8, %177 : vector<8x128xf32>
    %201 = arith.addf %199, %200 : vector<8x128xf32>
    %cst_76 = arith.constant 1.000000e+00 : f32
    %202 = vector.broadcast %cst_76 : f32 to vector<8x128xf32>
    %203 = arith.cmpf ogt, %198, %202 : vector<8x128xf32>
    %204 = arith.extui %203 : vector<8x128xi1> to vector<8x128xi32>
    %205 = arith.sitofp %204 : vector<8x128xi32> to vector<8x128xf32>
    %c8_i32_77 = arith.constant 8 : i32
    %206 = arith.muli %c7_i32, %c8_i32_77 : i32
    %207 = tpu.assume_multiple %206, 8 : i32
    %208 = arith.index_cast %207 : i32 to index
    %c0_78 = arith.constant 0 : index
    %209 = vector.load %arg20[%208, %c0_78] : memref<64x128xf32, #tpu.memory_space<vmem>>, vector<8x128xf32>
    tpu.vector_store %arg20[%208, %c0_78], %205 {strides = array<i32>} : memref<64x128xf32, #tpu.memory_space<vmem>>, vector<8x128xf32>,
    %210 = arith.addf %186, %205 : vector<8x128xf32>
    %c8_i32_79 = arith.constant 8 : i32
    %c0_80 = arith.constant 0 : index
    %c0_81 = arith.constant 0 : index
    %211 = vector.load %arg20[%c0_80, %c0_81] : memref<64x128xf32, #tpu.memory_space<vmem>>, vector<64x128xf32>
    %212 = arith.truncf %211 : vector<64x128xf32> to vector<64x128xbf16>
    %c0_82 = arith.constant 0 : index
    %c0_83 = arith.constant 0 : index
    %213 = vector.load %arg5[%c0_82, %c0_83] : memref<128x128xbf16, #tpu.memory_space<vmem>>, vector<128x128xbf16>
    %cst_84 = arith.constant dense<0.000000e+00> : vector<64x128xf32>
    %214 = tpu.matmul %212, %213, %cst_84 {dimension_numbers = #tpu.dot_dimension_numbers<[1], [0], [0], [1], [0, 0, 1, 1], [], []>} : vector<64x128xbf16>, vector<128x128xbf16>, vector<64x128xf32> -> vector<64x128xf32>
    %c0_85 = arith.constant 0 : index
    %c0_86 = arith.constant 0 : index
    %215 = vector.load %arg21[%c0_85, %c0_86] : memref<64x128xf32, #tpu.memory_space<vmem>>, vector<64x128xf32>
    tpu.vector_store %arg21[%c0_85, %c0_86], %214 {strides = array<i32>} : memref<64x128xf32, #tpu.memory_space<vmem>>, vector<64x128xf32>,
    %c0_87 = arith.constant 0 : index
    %c0_88 = arith.constant 0 : index
    %216 = vector.load %arg18[%c0_87, %c0_88] : memref<8x128xf32, #tpu.memory_space<vmem>>, vector<8x128xf32>
    %c0_i32_89 = arith.constant 0 : i32
    %217 = arith.mulf %12, %216 : vector<8x128xf32>
    %c8_i32_90 = arith.constant 8 : i32
    %218 = arith.muli %c0_i32_89, %c8_i32_90 : i32
    %219 = tpu.assume_multiple %218, 8 : i32
    %220 = arith.index_cast %219 : i32 to index
    %c0_91 = arith.constant 0 : index
    %221 = vector.load %arg21[%220, %c0_91] : memref<64x128xf32, #tpu.memory_space<vmem>>, vector<8x128xf32>
    %222 = arith.mulf %14, %221 : vector<8x128xf32>
    %223 = arith.addf %217, %222 : vector<8x128xf32>
    %224 = arith.index_cast %c0_i32_89 : i32 to index
    %c0_92 = arith.constant 0 : index
    %c0_93 = arith.constant 0 : index
    %225 = vector.load %arg10[%224, %c0_92, %c0_93] : memref<8x8x128xf32, #tpu.memory_space<vmem>>, vector<1x8x128xf32>
    %226 = vector.shape_cast %225 : vector<1x8x128xf32> to vector<8x128xf32>
    %227 = vector.shape_cast %223 : vector<8x128xf32> to vector<1x8x128xf32>
    tpu.vector_store %arg10[%224, %c0_92, %c0_93], %227 {strides = array<i32>} : memref<8x8x128xf32, #tpu.memory_space<vmem>>, vector<1x8x128xf32>,
    %c1_i32_94 = arith.constant 1 : i32
    %228 = arith.mulf %12, %223 : vector<8x128xf32>
    %c8_i32_95 = arith.constant 8 : i32
    %229 = arith.muli %c1_i32_94, %c8_i32_95 : i32
    %230 = tpu.assume_multiple %229, 8 : i32
    %231 = arith.index_cast %230 : i32 to index
    %c0_96 = arith.constant 0 : index
    %232 = vector.load %arg21[%231, %c0_96] : memref<64x128xf32, #tpu.memory_space<vmem>>, vector<8x128xf32>
    %233 = arith.mulf %14, %232 : vector<8x128xf32>
    %234 = arith.addf %228, %233 : vector<8x128xf32>
    %235 = arith.index_cast %c1_i32_94 : i32 to index
    %c0_97 = arith.constant 0 : index
    %c0_98 = arith.constant 0 : index
    %236 = vector.load %arg10[%235, %c0_97, %c0_98] : memref<8x8x128xf32, #tpu.memory_space<vmem>>, vector<1x8x128xf32>
    %237 = vector.shape_cast %236 : vector<1x8x128xf32> to vector<8x128xf32>
    %238 = vector.shape_cast %234 : vector<8x128xf32> to vector<1x8x128xf32>
    tpu.vector_store %arg10[%235, %c0_97, %c0_98], %238 {strides = array<i32>} : memref<8x8x128xf32, #tpu.memory_space<vmem>>, vector<1x8x128xf32>,
    %c2_i32_99 = arith.constant 2 : i32
    %239 = arith.mulf %12, %234 : vector<8x128xf32>
    %c8_i32_100 = arith.constant 8 : i32
    %240 = arith.muli %c2_i32_99, %c8_i32_100 : i32
    %241 = tpu.assume_multiple %240, 8 : i32
    %242 = arith.index_cast %241 : i32 to index
    %c0_101 = arith.constant 0 : index
    %243 = vector.load %arg21[%242, %c0_101] : memref<64x128xf32, #tpu.memory_space<vmem>>, vector<8x128xf32>
    %244 = arith.mulf %14, %243 : vector<8x128xf32>
    %245 = arith.addf %239, %244 : vector<8x128xf32>
    %246 = arith.index_cast %c2_i32_99 : i32 to index
    %c0_102 = arith.constant 0 : index
    %c0_103 = arith.constant 0 : index
    %247 = vector.load %arg10[%246, %c0_102, %c0_103] : memref<8x8x128xf32, #tpu.memory_space<vmem>>, vector<1x8x128xf32>
    %248 = vector.shape_cast %247 : vector<1x8x128xf32> to vector<8x128xf32>
    %249 = vector.shape_cast %245 : vector<8x128xf32> to vector<1x8x128xf32>
    tpu.vector_store %arg10[%246, %c0_102, %c0_103], %249 {strides = array<i32>} : memref<8x8x128xf32, #tpu.memory_space<vmem>>, vector<1x8x128xf32>,
    %c3_i32_104 = arith.constant 3 : i32
    %250 = arith.mulf %12, %245 : vector<8x128xf32>
    %c8_i32_105 = arith.constant 8 : i32
    %251 = arith.muli %c3_i32_104, %c8_i32_105 : i32
    %252 = tpu.assume_multiple %251, 8 : i32
    %253 = arith.index_cast %252 : i32 to index
    %c0_106 = arith.constant 0 : index
    %254 = vector.load %arg21[%253, %c0_106] : memref<64x128xf32, #tpu.memory_space<vmem>>, vector<8x128xf32>
    %255 = arith.mulf %14, %254 : vector<8x128xf32>
    %256 = arith.addf %250, %255 : vector<8x128xf32>
    %257 = arith.index_cast %c3_i32_104 : i32 to index
    %c0_107 = arith.constant 0 : index
    %c0_108 = arith.constant 0 : index
    %258 = vector.load %arg10[%257, %c0_107, %c0_108] : memref<8x8x128xf32, #tpu.memory_space<vmem>>, vector<1x8x128xf32>
    %259 = vector.shape_cast %258 : vector<1x8x128xf32> to vector<8x128xf32>
    %260 = vector.shape_cast %256 : vector<8x128xf32> to vector<1x8x128xf32>
    tpu.vector_store %arg10[%257, %c0_107, %c0_108], %260 {strides = array<i32>} : memref<8x8x128xf32, #tpu.memory_space<vmem>>, vector<1x8x128xf32>,
    %c4_i32_109 = arith.constant 4 : i32
    %261 = arith.mulf %12, %256 : vector<8x128xf32>
    %c8_i32_110 = arith.constant 8 : i32
    %262 = arith.muli %c4_i32_109, %c8_i32_110 : i32
    %263 = tpu.assume_multiple %262, 8 : i32
    %264 = arith.index_cast %263 : i32 to index
    %c0_111 = arith.constant 0 : index
    %265 = vector.load %arg21[%264, %c0_111] : memref<64x128xf32, #tpu.memory_space<vmem>>, vector<8x128xf32>
    %266 = arith.mulf %14, %265 : vector<8x128xf32>
    %267 = arith.addf %261, %266 : vector<8x128xf32>
    %268 = arith.index_cast %c4_i32_109 : i32 to index
    %c0_112 = arith.constant 0 : index
    %c0_113 = arith.constant 0 : index
    %269 = vector.load %arg10[%268, %c0_112, %c0_113] : memref<8x8x128xf32, #tpu.memory_space<vmem>>, vector<1x8x128xf32>
    %270 = vector.shape_cast %269 : vector<1x8x128xf32> to vector<8x128xf32>
    %271 = vector.shape_cast %267 : vector<8x128xf32> to vector<1x8x128xf32>
    tpu.vector_store %arg10[%268, %c0_112, %c0_113], %271 {strides = array<i32>} : memref<8x8x128xf32, #tpu.memory_space<vmem>>, vector<1x8x128xf32>,
    %c5_i32_114 = arith.constant 5 : i32
    %272 = arith.mulf %12, %267 : vector<8x128xf32>
    %c8_i32_115 = arith.constant 8 : i32
    %273 = arith.muli %c5_i32_114, %c8_i32_115 : i32
    %274 = tpu.assume_multiple %273, 8 : i32
    %275 = arith.index_cast %274 : i32 to index
    %c0_116 = arith.constant 0 : index
    %276 = vector.load %arg21[%275, %c0_116] : memref<64x128xf32, #tpu.memory_space<vmem>>, vector<8x128xf32>
    %277 = arith.mulf %14, %276 : vector<8x128xf32>
    %278 = arith.addf %272, %277 : vector<8x128xf32>
    %279 = arith.index_cast %c5_i32_114 : i32 to index
    %c0_117 = arith.constant 0 : index
    %c0_118 = arith.constant 0 : index
    %280 = vector.load %arg10[%279, %c0_117, %c0_118] : memref<8x8x128xf32, #tpu.memory_space<vmem>>, vector<1x8x128xf32>
    %281 = vector.shape_cast %280 : vector<1x8x128xf32> to vector<8x128xf32>
    %282 = vector.shape_cast %278 : vector<8x128xf32> to vector<1x8x128xf32>
    tpu.vector_store %arg10[%279, %c0_117, %c0_118], %282 {strides = array<i32>} : memref<8x8x128xf32, #tpu.memory_space<vmem>>, vector<1x8x128xf32>,
    %c6_i32_119 = arith.constant 6 : i32
    %283 = arith.mulf %12, %278 : vector<8x128xf32>
    %c8_i32_120 = arith.constant 8 : i32
    %284 = arith.muli %c6_i32_119, %c8_i32_120 : i32
    %285 = tpu.assume_multiple %284, 8 : i32
    %286 = arith.index_cast %285 : i32 to index
    %c0_121 = arith.constant 0 : index
    %287 = vector.load %arg21[%286, %c0_121] : memref<64x128xf32, #tpu.memory_space<vmem>>, vector<8x128xf32>
    %288 = arith.mulf %14, %287 : vector<8x128xf32>
    %289 = arith.addf %283, %288 : vector<8x128xf32>
    %290 = arith.index_cast %c6_i32_119 : i32 to index
    %c0_122 = arith.constant 0 : index
    %c0_123 = arith.constant 0 : index
    %291 = vector.load %arg10[%290, %c0_122, %c0_123] : memref<8x8x128xf32, #tpu.memory_space<vmem>>, vector<1x8x128xf32>
    %292 = vector.shape_cast %291 : vector<1x8x128xf32> to vector<8x128xf32>
    %293 = vector.shape_cast %289 : vector<8x128xf32> to vector<1x8x128xf32>
    tpu.vector_store %arg10[%290, %c0_122, %c0_123], %293 {strides = array<i32>} : memref<8x8x128xf32, #tpu.memory_space<vmem>>, vector<1x8x128xf32>,
    %c7_i32_124 = arith.constant 7 : i32
    %294 = arith.mulf %12, %289 : vector<8x128xf32>
    %c8_i32_125 = arith.constant 8 : i32
    %295 = arith.muli %c7_i32_124, %c8_i32_125 : i32
    %296 = tpu.assume_multiple %295, 8 : i32
    %297 = arith.index_cast %296 : i32 to index
    %c0_126 = arith.constant 0 : index
    %298 = vector.load %arg21[%297, %c0_126] : memref<64x128xf32, #tpu.memory_space<vmem>>, vector<8x128xf32>
    %299 = arith.mulf %14, %298 : vector<8x128xf32>
    %300 = arith.addf %294, %299 : vector<8x128xf32>
    %301 = arith.index_cast %c7_i32_124 : i32 to index
    %c0_127 = arith.constant 0 : index
    %c0_128 = arith.constant 0 : index
    %302 = vector.load %arg10[%301, %c0_127, %c0_128] : memref<8x8x128xf32, #tpu.memory_space<vmem>>, vector<1x8x128xf32>
    %303 = vector.shape_cast %302 : vector<1x8x128xf32> to vector<8x128xf32>
    %304 = vector.shape_cast %300 : vector<8x128xf32> to vector<1x8x128xf32>
    tpu.vector_store %arg10[%301, %c0_127, %c0_128], %304 {strides = array<i32>} : memref<8x8x128xf32, #tpu.memory_space<vmem>>, vector<1x8x128xf32>,
    %c8_i32_129 = arith.constant 8 : i32
    %c0_130 = arith.constant 0 : index
    %c0_131 = arith.constant 0 : index
    %305 = vector.load %arg15[%c0_130, %c0_131] : memref<8x128xf32, #tpu.memory_space<vmem>>, vector<8x128xf32>
    tpu.vector_store %arg15[%c0_130, %c0_131], %205 {strides = array<i32>} : memref<8x128xf32, #tpu.memory_space<vmem>>, vector<8x128xf32>,
    %c0_132 = arith.constant 0 : index
    %c0_133 = arith.constant 0 : index
    %306 = vector.load %arg16[%c0_132, %c0_133] : memref<8x128xf32, #tpu.memory_space<vmem>>, vector<8x128xf32>
    tpu.vector_store %arg16[%c0_132, %c0_133], %198 {strides = array<i32>} : memref<8x128xf32, #tpu.memory_space<vmem>>, vector<8x128xf32>,
    %c0_134 = arith.constant 0 : index
    %c0_135 = arith.constant 0 : index
    %307 = vector.load %arg17[%c0_134, %c0_135] : memref<8x128xf32, #tpu.memory_space<vmem>>, vector<8x128xf32>
    tpu.vector_store %arg17[%c0_134, %c0_135], %201 {strides = array<i32>} : memref<8x128xf32, #tpu.memory_space<vmem>>, vector<8x128xf32>,
    %c0_136 = arith.constant 0 : index
    %c0_137 = arith.constant 0 : index
    %308 = vector.load %arg18[%c0_136, %c0_137] : memref<8x128xf32, #tpu.memory_space<vmem>>, vector<8x128xf32>
    tpu.vector_store %arg18[%c0_136, %c0_137], %300 {strides = array<i32>} : memref<8x128xf32, #tpu.memory_space<vmem>>, vector<8x128xf32>,
    %c0_138 = arith.constant 0 : index
    %c0_139 = arith.constant 0 : index
    %309 = vector.load %arg19[%c0_138, %c0_139] : memref<8x128xf32, #tpu.memory_space<vmem>>, vector<8x128xf32>
    tpu.vector_store %arg19[%c0_138, %c0_139], %210 {strides = array<i32>} : memref<8x128xf32, #tpu.memory_space<vmem>>, vector<8x128xf32>,
    %c0_i32_140 = arith.constant 0 : i32
    %310 = arith.cmpi eq, %arg1, %c0_i32_140 : i32
    %311 = arith.extui %310 : i1 to i32
    %c0_i32_141 = arith.constant 0 : i32
    %312 = arith.cmpi ne, %311, %c0_i32_141 : i32
    scf.if %312 {
      %c0_142 = arith.constant 0 : index
      %c0_143 = arith.constant 0 : index
      %313 = vector.load %arg11[%c0_142, %c0_143] : memref<8x128xf32, #tpu.memory_space<vmem>>, vector<8x128xf32>
      tpu.vector_store %arg11[%c0_142, %c0_143], %205 {strides = array<i32>} : memref<8x128xf32, #tpu.memory_space<vmem>>, vector<8x128xf32>,
      %c0_144 = arith.constant 0 : index
      %c0_145 = arith.constant 0 : index
      %314 = vector.load %arg12[%c0_144, %c0_145] : memref<8x128xf32, #tpu.memory_space<vmem>>, vector<8x128xf32>
      tpu.vector_store %arg12[%c0_144, %c0_145], %198 {strides = array<i32>} : memref<8x128xf32, #tpu.memory_space<vmem>>, vector<8x128xf32>,
      %c0_146 = arith.constant 0 : index
      %c0_147 = arith.constant 0 : index
      %315 = vector.load %arg13[%c0_146, %c0_147] : memref<8x128xf32, #tpu.memory_space<vmem>>, vector<8x128xf32>
      tpu.vector_store %arg13[%c0_146, %c0_147], %300 {strides = array<i32>} : memref<8x128xf32, #tpu.memory_space<vmem>>, vector<8x128xf32>,
      %316 = vector.shape_cast %210 : vector<8x128xf32> to vector<1x8x128xf32>
      %c0_148 = arith.constant 0 : index
      %c0_149 = arith.constant 0 : index
      %c0_150 = arith.constant 0 : index
      %317 = vector.load %arg14[%c0_148, %c0_149, %c0_150] : memref<1x8x128xf32, #tpu.memory_space<vmem>>, vector<1x8x128xf32>
      tpu.vector_store %arg14[%c0_148, %c0_149, %c0_150], %316 {strides = array<i32>} : memref<1x8x128xf32, #tpu.memory_space<vmem>>, vector<1x8x128xf32>,
    } else {
    }
    return
  }
  func.func @transform_0(%arg0: i32, %arg1: i32, %arg2: memref<1xi32, #tpu.memory_space<smem>>) -> (i32, i32, i32) {
    %c0_i32 = arith.constant 0 : i32
    %c0_i32_0 = arith.constant 0 : i32
    return %arg1, %arg0, %c0_i32 : i32, i32, i32
  }
  func.func @transform_1(%arg0: i32, %arg1: i32, %arg2: memref<1xi32, #tpu.memory_space<smem>>) -> (i32, i32) {
    %c0_i32 = arith.constant 0 : i32
    %c0_i32_0 = arith.constant 0 : i32
    %c0_i32_1 = arith.constant 0 : i32
    return %c0_i32, %c0_i32_0 : i32, i32
  }
  func.func @transform_2(%arg0: i32, %arg1: i32, %arg2: memref<1xi32, #tpu.memory_space<smem>>) -> (i32, i32) {
    %c0_i32 = arith.constant 0 : i32
    %c0_i32_0 = arith.constant 0 : i32
    %c0_i32_1 = arith.constant 0 : i32
    return %c0_i32, %c0_i32_0 : i32, i32
  }
  func.func @transform_3(%arg0: i32, %arg1: i32, %arg2: memref<1xi32, #tpu.memory_space<smem>>) -> (i32, i32) {
    %c0_i32 = arith.constant 0 : i32
    %c0_i32_0 = arith.constant 0 : i32
    %c0_i32_1 = arith.constant 0 : i32
    return %c0_i32, %c0_i32_0 : i32, i32
  }
  func.func @transform_4(%arg0: i32, %arg1: i32, %arg2: memref<1xi32, #tpu.memory_space<smem>>) -> (i32, i32) {
    %c0_i32 = arith.constant 0 : i32
    %c0_i32_0 = arith.constant 0 : i32
    %c0_i32_1 = arith.constant 0 : i32
    return %c0_i32, %c0_i32_0 : i32, i32
  }
  func.func @transform_5(%arg0: i32, %arg1: i32, %arg2: memref<1xi32, #tpu.memory_space<smem>>) -> (i32, i32) {
    %c0_i32 = arith.constant 0 : i32
    %c0_i32_0 = arith.constant 0 : i32
    %c0_i32_1 = arith.constant 0 : i32
    return %c0_i32, %c0_i32_0 : i32, i32
  }
  func.func @transform_6(%arg0: i32, %arg1: i32, %arg2: memref<1xi32, #tpu.memory_space<smem>>) -> (i32, i32) {
    %c0_i32 = arith.constant 0 : i32
    %c0_i32_0 = arith.constant 0 : i32
    %c0_i32_1 = arith.constant 0 : i32
    return %c0_i32, %c0_i32_0 : i32, i32
  }
  func.func @transform_7(%arg0: i32, %arg1: i32, %arg2: memref<1xi32, #tpu.memory_space<smem>>) -> (i32, i32, i32) {
    %c0_i32 = arith.constant 0 : i32
    %c0_i32_0 = arith.constant 0 : i32
    return %arg1, %arg0, %c0_i32 : i32, i32, i32
  }
  func.func @transform_8(%arg0: i32, %arg1: i32, %arg2: memref<1xi32, #tpu.memory_space<smem>>) -> (i32, i32) {
    %c0_i32 = arith.constant 0 : i32
    %c0_i32_0 = arith.constant 0 : i32
    return %arg0, %c0_i32 : i32, i32
  }
  func.func @transform_9(%arg0: i32, %arg1: i32, %arg2: memref<1xi32, #tpu.memory_space<smem>>) -> (i32, i32) {
    %c0_i32 = arith.constant 0 : i32
    %c0_i32_0 = arith.constant 0 : i32
    return %arg0, %c0_i32 : i32, i32
  }
  func.func @transform_10(%arg0: i32, %arg1: i32, %arg2: memref<1xi32, #tpu.memory_space<smem>>) -> (i32, i32) {
    %c0_i32 = arith.constant 0 : i32
    %c0_i32_0 = arith.constant 0 : i32
    return %arg0, %c0_i32 : i32, i32
  }
  func.func @transform_11(%arg0: i32, %arg1: i32, %arg2: memref<1xi32, #tpu.memory_space<smem>>) -> (i32, i32, i32) {
    %c0_i32 = arith.constant 0 : i32
    %c0_i32_0 = arith.constant 0 : i32
    %c0_i32_1 = arith.constant 0 : i32
    return %arg0, %c0_i32, %c0_i32_0 : i32, i32, i32
  }
}

</mosaic_0001>

<llo_original>
// kernel: tpu_custom_call.1
$region0: #{tpu_custom_call.1}
  #allocation0 [shape = 'u32[]', space=smem, size = 0x4, offset = 0x4, fixed_abs, tag = 'smem constant byte address 0x4 - core index']
  #allocation1 [shape = 'u32[72,128]{1,0:T(1,128)}', space=vmem, size = 0x9000, scoped, tag = 'internal scratch']
  #allocation2 [shape = 'f32[8,128]{1,0:T(8,128)}', space=vmem, size = 0x1000, scoped, tag = 'scratch operand']
  #allocation3 [shape = 'f32[8,128]{1,0:T(8,128)}', space=vmem, size = 0x1000, scoped, tag = 'scratch operand']
  #allocation4 [shape = 'f32[8,128]{1,0:T(8,128)}', space=vmem, size = 0x1000, scoped, tag = 'scratch operand']
  #allocation5 [shape = 'f32[8,128]{1,0:T(8,128)}', space=vmem, size = 0x1000, scoped, tag = 'scratch operand']
  #allocation6 [shape = 'f32[8,128]{1,0:T(8,128)}', space=vmem, size = 0x1000, scoped, tag = 'scratch operand']
  #allocation7 [shape = 'f32[64,128]{1,0:T(8,128)}', space=vmem, size = 0x8000, scoped, tag = 'scratch operand']
  #allocation8 [shape = 'f32[64,128]{1,0:T(8,128)}', space=vmem, size = 0x8000, scoped, tag = 'scratch operand']
  #allocation9 [shape = 's32[1]{0}', space=sflag, size = 0x4, scoped, tag = 'scoped memory for tpu_custom_call.1']
  #allocation10 [shape = 's32[1]{0:T(128)S(6)}', space=smem, size = 0x200, scoped, tag = 'prefetched SMEM operand 0']
  %s0 = inlined_call_operand.<no memory space> [shape: s32[1], index: 0, kind: input, shape index: {}]
  %s1 = inlined_call_operand.hbm [shape: bf16[8,8,128], index: 1, kind: input, shape index: {}]
  %s2 = inlined_call_operand.hbm [shape: bf16[128,128], index: 2, kind: input, shape index: {}]
  %s3 = inlined_call_operand.hbm [shape: bf16[128,128], index: 3, kind: input, shape index: {}]
  %s4 = inlined_call_operand.vmem [shape: f32[1,128], index: 4, kind: input, shape index: {}]
  %s5 = inlined_call_operand.vmem [shape: f32[1,128], index: 5, kind: input, shape index: {}]
  %s6 = inlined_call_operand.vmem [shape: f32[1,128], index: 6, kind: input, shape index: {}]
  %s7 = inlined_call_operand.vmem [shape: f32[1,128], index: 7, kind: input, shape index: {}]
  %s8 = inlined_call_operand.hbm [shape: f32[8,8,128], index: 8, kind: output, shape index: {0}]
  %s9 = inlined_call_operand.hbm [shape: f32[8,128], index: 9, kind: output, shape index: {1}]
  %s10 = inlined_call_operand.hbm [shape: f32[8,128], index: 10, kind: output, shape index: {2}]
  %s11 = inlined_call_operand.hbm [shape: f32[8,128], index: 11, kind: output, shape index: {3}]
  %s12 = inlined_call_operand.hbm [shape: f32[1,8,128], index: 12, kind: output, shape index: {4}]
  %13 = xla_tuple %s8, %s9, %s10, %s11, %s12
  %s14 = sld [smem:[#allocation0]]
  $region90: #{tpu_custom_call.1} parent=0
    _
  %s16 = ssub.s32 1, %s14
  %s17 = scalar_select 0, %s16, %s14
  %18 = sst [smem:[#allocation10]] %s0
  $region1: #{tpu_custom_call.1} parent=0
    #allocation11 [shape = 'u8[16384]{0}', space=vmem, size = 0x4000, scoped, tag = 'input window, operand 1, single buffered']
    #allocation12 [shape = 's32[1]{0}', space=sflag, size = 0x4, scoped, tag = 'scoped memory for tpu_custom_call.1']
    #allocation13 [shape = 's32[1]{0}', space=sflag, size = 0x4, scoped, tag = 'scoped memory for tpu_custom_call.1']
    #allocation14 [shape = 'u8[32768]{0}', space=vmem, size = 0x8000, scoped, tag = 'input window, operand 2, single buffered']
    #allocation15 [shape = 's32[1]{0}', space=sflag, size = 0x4, scoped, tag = 'scoped memory for tpu_custom_call.1']
    #allocation16 [shape = 'u8[32768]{0}', space=vmem, size = 0x8000, scoped, tag = 'input window, operand 3, single buffered']
    #allocation17 [shape = 'u8[32768]{0}', space=vmem, size = 0x8000, scoped, tag = 'output window, operand 0, single buffered']
    #allocation18 [shape = 'u8[4096]{0}', space=vmem, size = 0x1000, scoped, tag = 'output window, operand 1, single buffered']
    #allocation19 [shape = 's32[1]{0}', space=sflag, size = 0x4, scoped, tag = 'scoped memory for tpu_custom_call.1']
    #allocation20 [shape = 'u8[4096]{0}', space=vmem, size = 0x1000, scoped, tag = 'output window, operand 2, single buffered']
    #allocation21 [shape = 'u8[4096]{0}', space=vmem, size = 0x1000, scoped, tag = 'output window, operand 3, single buffered']
    #allocation22 [shape = 's32[1]{0}', space=sflag, size = 0x4, scoped, tag = 'scoped memory for tpu_custom_call.1']
    #allocation23 [shape = 'u8[4096]{0}', space=vmem, size = 0x1000, scoped, tag = 'output window, operand 4, single buffered']
    %19 = vsyncpa [#allocation12], 0
    %20 = vsyncpa [#allocation15], 0
    %21 = vsyncpa [#allocation13], 0
    %22 = vsyncpa [#allocation19], 0
    %23 = vsyncpa [#allocation22], 0
    // Predicated region
    $region2: #{tpu_custom_call.1} parent=1 // pred_check
      _
    $region3: #{tpu_custom_call.1} parent=1 // pred_check_branch
      %25 = sbr.rel (0) target = $region5
    $region4: #{tpu_custom_call.1} parent=1 // pred_region
      %27 = vsyncadd [#allocation12], 0
      %s28 = sshll.u32 %s1, 4
      %s29 = int_to_ptr.hbm [resolvable:$true] %s28
      %s30 = sshll.u32 [#allocation11], 4
      %s31 = int_to_ptr.vmem [resolvable:$true] %s30
      %36 = dma.hbm_to_vmem [thread:$0]  %s29, 512, %s31, [#allocation12], 64, 64, 4
    $region5: #{tpu_custom_call.1} parent=1 // pred_fallthru
      _
    // Predicated region
    $region6: #{tpu_custom_call.1} parent=1 // pred_check
      _
    $region7: #{tpu_custom_call.1} parent=1 // pred_check_branch
      %38 = sbr.rel (0) target = $region9
    $region8: #{tpu_custom_call.1} parent=1 // pred_region
      %40 = vsyncadd [#allocation15], 0
      %s41 = sshll.u32 %s2, 4
      %s42 = int_to_ptr.hbm [resolvable:$true] %s41
      %s43 = sshll.u32 [#allocation14], 4
      %s44 = int_to_ptr.vmem [resolvable:$true] %s43
      %49 = dma.hbm_to_vmem [thread:$0]  %s42, 1024, %s44, [#allocation15], 64, 64, 4
    $region9: #{tpu_custom_call.1} parent=1 // pred_fallthru
      _
    // Predicated region
    $region10: #{tpu_custom_call.1} parent=1 // pred_check
      _
    $region11: #{tpu_custom_call.1} parent=1 // pred_check_branch
      %51 = sbr.rel (0) target = $region13
    $region12: #{tpu_custom_call.1} parent=1 // pred_region
      %53 = vsyncadd [#allocation15], 0
      %s54 = sshll.u32 %s3, 4
      %s55 = int_to_ptr.hbm [resolvable:$true] %s54
      %s56 = sshll.u32 [#allocation16], 4
      %s57 = int_to_ptr.vmem [resolvable:$true] %s56
      %62 = dma.hbm_to_vmem [thread:$0]  %s55, 1024, %s57, [#allocation15], 64, 64, 4
    $region13: #{tpu_custom_call.1} parent=1 // pred_fallthru
      _
    // Predicated region
    $region14: #{tpu_custom_call.1} parent=1 // pred_check
      _
    $region15: #{tpu_custom_call.1} parent=1 // pred_check_branch
      %64 = sbr.rel (0) target = $region17
    $region16: #{tpu_custom_call.1} parent=1 // pred_region
      _
    $region17: #{tpu_custom_call.1} parent=1 // pred_fallthru
      _
    // Predicated region
    $region18: #{tpu_custom_call.1} parent=1 // pred_check
      _
    $region19: #{tpu_custom_call.1} parent=1 // pred_check_branch
      %66 = sbr.rel (0) target = $region21
    $region20: #{tpu_custom_call.1} parent=1 // pred_region
      _
    $region21: #{tpu_custom_call.1} parent=1 // pred_fallthru
      _
    // Predicated region
    $region22: #{tpu_custom_call.1} parent=1 // pred_check
      _
    $region23: #{tpu_custom_call.1} parent=1 // pred_check_branch
      %68 = sbr.rel (0) target = $region25
    $region24: #{tpu_custom_call.1} parent=1 // pred_region
      _
    $region25: #{tpu_custom_call.1} parent=1 // pred_fallthru
      _
    // Predicated region
    $region26: #{tpu_custom_call.1} parent=1 // pred_check
      _
    $region27: #{tpu_custom_call.1} parent=1 // pred_check_branch
      %70 = sbr.rel (0) target = $region29
    $region28: #{tpu_custom_call.1} parent=1 // pred_region
      _
    $region29: #{tpu_custom_call.1} parent=1 // pred_fallthru
      _
    // Predicated region
    $region30: #{tpu_custom_call.1} parent=1 // pred_check
      _
    $region31: #{tpu_custom_call.1} parent=1 // pred_check_branch
      %72 = sbr.rel (0) target = $region33
    $region32: #{tpu_custom_call.1} parent=1 // pred_region
      %74 = dma.done [#allocation12], 512
    $region33: #{tpu_custom_call.1} parent=1 // pred_fallthru
      _
    // Predicated region
    $region34: #{tpu_custom_call.1} parent=1 // pred_check
      _
    $region35: #{tpu_custom_call.1} parent=1 // pred_check_branch
      %76 = sbr.rel (0) target = $region37
    $region36: #{tpu_custom_call.1} parent=1 // pred_region
      %78 = dma.done [#allocation15], 1024
    $region37: #{tpu_custom_call.1} parent=1 // pred_fallthru
      _
    // Predicated region
    $region38: #{tpu_custom_call.1} parent=1 // pred_check
      _
    $region39: #{tpu_custom_call.1} parent=1 // pred_check_branch
      %80 = sbr.rel (0) target = $region41
    $region40: #{tpu_custom_call.1} parent=1 // pred_region
      %82 = dma.done [#allocation15], 1024
    $region41: #{tpu_custom_call.1} parent=1 // pred_fallthru
      _
    %p83 = scmp.eq.s32.totalorder 0, 0
    // Predicated region
    $region42: #{tpu_custom_call.1} parent=1 // pred_check
      %p84 = pneg %p83
    $region43: #{tpu_custom_call.1} parent=1 // pred_check_branch
      %86 = sbr.rel (%p84) target = $region45
    $region44: #{tpu_custom_call.1} parent=1 // pred_region
      %87 = vst [vmem:[#allocation2] sm:$0xff] 0.0
      %88 = vst [vmem:[#allocation3] sm:$0xff] 0.0
      %89 = vst [vmem:[#allocation4] sm:$0xff] 0.0
      %90 = vst [vmem:[#allocation5] sm:$0xff] 0.0
      %91 = vst [vmem:[#allocation6] sm:$0xff] 0.0
    $region45: #{tpu_custom_call.1} parent=1 // pred_fallthru
      _
    %v92 = vld [vmem:[%s4] sm:$0x1]
    %v93 = vld [vmem:[%s5] sm:$0x1]
    %v94 = vld [vmem:[%s6] sm:$0x1]
    %v95 = vld [vmem:[%s7] sm:$0x1]
    %v97 = vperm.slane %v92, 0
    %v100 = vperm.slane %v93, 0
    %v103 = vperm.slane %v94, 0
    %v106 = vperm.slane %v95, 0
    %v108 = vld [vmem:[#allocation2] sm:$0xff]
    %v109 = vld [vmem:[#allocation3] sm:$0xff]
    %v110 = vld [vmem:[#allocation4] sm:$0xff]
    %v111 = vld [vmem:[#allocation6] sm:$0xff]
    %v112 = vld [vmem:[#allocation11] sm:$0xf]
    %v113 = vunpack.c.l.bf16 %v112
    %v114 = vpack.c.bf16 %v108, %v108
    %v115 = vld [vmem:[#allocation14] sm:$0xf]
    %v116 = vld [vmem:[#allocation14 + $0x4] sm:$0xf]
    %v117 = vld [vmem:[#allocation14 + $0x8] sm:$0xf]
    %v118 = vld [vmem:[#allocation14 + $0xc] sm:$0xf]
    %v119 = vld [vmem:[#allocation14 + $0x10] sm:$0xf]
    %v120 = vld [vmem:[#allocation14 + $0x14] sm:$0xf]
    %v121 = vld [vmem:[#allocation14 + $0x18] sm:$0xf]
    %v122 = vld [vmem:[#allocation14 + $0x1c] sm:$0xf]
    %v123 = vld [vmem:[#allocation14 + $0x20] sm:$0xf]
    %v124 = vld [vmem:[#allocation14 + $0x24] sm:$0xf]
    %v125 = vld [vmem:[#allocation14 + $0x28] sm:$0xf]
    %v126 = vld [vmem:[#allocation14 + $0x2c] sm:$0xf]
    %v127 = vld [vmem:[#allocation14 + $0x30] sm:$0xf]
    %v128 = vld [vmem:[#allocation14 + $0x34] sm:$0xf]
    %v129 = vld [vmem:[#allocation14 + $0x38] sm:$0xf]
    %v130 = vld [vmem:[#allocation14 + $0x3c] sm:$0xf]
    %v147 = vunpack.c.l.b16 %v115
    %v148 = vunpack.c.l.b16 %v116
    %v149 = vunpack.c.l.b16 %v117
    %v150 = vunpack.c.l.b16 %v118
    %v151 = vunpack.c.l.b16 %v119
    %v152 = vunpack.c.l.b16 %v120
    %v153 = vunpack.c.l.b16 %v121
    %v154 = vunpack.c.l.b16 %v122
    %v155 = vunpack.c.l.b16 %v123
    %v156 = vunpack.c.l.b16 %v124
    %v157 = vunpack.c.l.b16 %v125
    %v158 = vunpack.c.l.b16 %v126
    %v159 = vunpack.c.l.b16 %v127
    %v160 = vunpack.c.l.b16 %v128
    %v161 = vunpack.c.l.b16 %v129
    %v162 = vunpack.c.l.b16 %v130
    %v163 = vpack.c.b16 %v148, %v147
    %v164 = vpack.c.b16 %v150, %v149
    %v165 = vpack.c.b16 %v152, %v151
    %v166 = vpack.c.b16 %v154, %v153
    %v167 = vpack.c.b16 %v156, %v155
    %v168 = vpack.c.b16 %v158, %v157
    %v169 = vpack.c.b16 %v160, %v159
    %v170 = vpack.c.b16 %v162, %v161
    %179 = vmatpush.bf16.msra.mxu0 %v170
    %180 = vmatpush.bf16.msra.mxu0 %v169
    %181 = vmatpush.bf16.msra.mxu0 %v168
    %182 = vmatpush.bf16.msra.mxu0 %v167
    %183 = vmatpush.bf16.msra.mxu0 %v166
    %184 = vmatpush.bf16.msra.mxu0 %v165
    %185 = vmatpush.bf16.msra.mxu0 %v164
    %186 = vmatpush.bf16.msra.mxu0 %v163
    %187 = vmatmul.bf16.gmra.mxu0 %v114
    %v188 = vpop.f32.mrf.mxu0
    %v189 = vadd.f32 0.0, %v188
    %v190 = vpop.f32.mrf.mxu0
    %191 = vdwg.mxu0
    %v192 = vadd.f32 %v113, %v189
    %v193 = vmul.f32 %v97, %v109
    %v194 = vmul.f32 %v100, %v110
    %v195 = vsub.f32 %v193, %v194
    %v196 = vadd.f32 %v195, %v192
    %v197 = vmul.f32 %v100, %v109
    %v198 = vmul.f32 %v97, %v110
    %v199 = vadd.f32 %v197, %v198
    %vm200 = vcmp.gt.f32.partialorder %v196, 1.0
    %v201 = vsel %vm200, 1, 0
    %v202 = vcvt.s32.f32 %v201
    %203 = vst [vmem:[#allocation7] sm:$0xff] %v202
    %v204 = vadd.f32 %v111, %v202
    %s205 = scalar_lea.vmem [#allocation11], 4
    %v206 = vld [vmem:[%s205] sm:$0xf]
    %v207 = vunpack.c.l.bf16 %v206
    %v208 = vpack.c.bf16 %v202, %v202
    %v209 = vld [vmem:[#allocation14] sm:$0xf]
    %v210 = vld [vmem:[#allocation14 + $0x4] sm:$0xf]
    %v211 = vld [vmem:[#allocation14 + $0x8] sm:$0xf]
    %v212 = vld [vmem:[#allocation14 + $0xc] sm:$0xf]
    %v213 = vld [vmem:[#allocation14 + $0x10] sm:$0xf]
    %v214 = vld [vmem:[#allocation14 + $0x14] sm:$0xf]
    %v215 = vld [vmem:[#allocation14 + $0x18] sm:$0xf]
    %v216 = vld [vmem:[#allocation14 + $0x1c] sm:$0xf]
    %v217 = vld [vmem:[#allocation14 + $0x20] sm:$0xf]
    %v218 = vld [vmem:[#allocation14 + $0x24] sm:$0xf]
    %v219 = vld [vmem:[#allocation14 + $0x28] sm:$0xf]
    %v220 = vld [vmem:[#allocation14 + $0x2c] sm:$0xf]
    %v221 = vld [vmem:[#allocation14 + $0x30] sm:$0xf]
    %v222 = vld [vmem:[#allocation14 + $0x34] sm:$0xf]
    %v223 = vld [vmem:[#allocation14 + $0x38] sm:$0xf]
    %v224 = vld [vmem:[#allocation14 + $0x3c] sm:$0xf]
    %v241 = vunpack.c.l.b16 %v209
    %v242 = vunpack.c.l.b16 %v210
    %v243 = vunpack.c.l.b16 %v211
    %v244 = vunpack.c.l.b16 %v212
    %v245 = vunpack.c.l.b16 %v213
    %v246 = vunpack.c.l.b16 %v214
    %v247 = vunpack.c.l.b16 %v215
    %v248 = vunpack.c.l.b16 %v216
    %v249 = vunpack.c.l.b16 %v217
    %v250 = vunpack.c.l.b16 %v218
    %v251 = vunpack.c.l.b16 %v219
    %v252 = vunpack.c.l.b16 %v220
    %v253 = vunpack.c.l.b16 %v221
    %v254 = vunpack.c.l.b16 %v222
    %v255 = vunpack.c.l.b16 %v223
    %v256 = vunpack.c.l.b16 %v224
    %v257 = vpack.c.b16 %v242, %v241
    %v258 = vpack.c.b16 %v244, %v243
    %v259 = vpack.c.b16 %v246, %v245
    %v260 = vpack.c.b16 %v248, %v247
    %v261 = vpack.c.b16 %v250, %v249
    %v262 = vpack.c.b16 %v252, %v251
    %v263 = vpack.c.b16 %v254, %v253
    %v264 = vpack.c.b16 %v256, %v255
    %273 = vmatpush.bf16.msra.mxu0 %v264
    %274 = vmatpush.bf16.msra.mxu0 %v263
    %275 = vmatpush.bf16.msra.mxu0 %v262
    %276 = vmatpush.bf16.msra.mxu0 %v261
    %277 = vmatpush.bf16.msra.mxu0 %v260
    %278 = vmatpush.bf16.msra.mxu0 %v259
    %279 = vmatpush.bf16.msra.mxu0 %v258
    %280 = vmatpush.bf16.msra.mxu0 %v257
    %281 = vmatmul.bf16.gmra.mxu0 %v208
    %v282 = vpop.f32.mrf.mxu0
    %v283 = vadd.f32 0.0, %v282
    %v284 = vpop.f32.mrf.mxu0
    %285 = vdwg.mxu0
    %v286 = vadd.f32 %v207, %v283
    %v287 = vmul.f32 %v97, %v196
    %v288 = vmul.f32 %v100, %v199
    %v289 = vsub.f32 %v287, %v288
    %v290 = vadd.f32 %v289, %v286
    %v291 = vmul.f32 %v100, %v196
    %v292 = vmul.f32 %v97, %v199
    %v293 = vadd.f32 %v291, %v292
    %vm294 = vcmp.gt.f32.partialorder %v290, 1.0
    %v295 = vsel %vm294, 1, 0
    %v296 = vcvt.s32.f32 %v295
    %s297 = scalar_lea.vmem [#allocation7], 8
    %298 = vst [vmem:[%s297] sm:$0xff] %v296
    %v299 = vadd.f32 %v204, %v296
    %s300 = scalar_lea.vmem [#allocation11], 8
    %v301 = vld [vmem:[%s300] sm:$0xf]
    %v302 = vunpack.c.l.bf16 %v301
    %v303 = vpack.c.bf16 %v296, %v296
    %v304 = vld [vmem:[#allocation14] sm:$0xf]
    %v305 = vld [vmem:[#allocation14 + $0x4] sm:$0xf]
    %v306 = vld [vmem:[#allocation14 + $0x8] sm:$0xf]
    %v307 = vld [vmem:[#allocation14 + $0xc] sm:$0xf]
    %v308 = vld [vmem:[#allocation14 + $0x10] sm:$0xf]
    %v309 = vld [vmem:[#allocation14 + $0x14] sm:$0xf]
    %v310 = vld [vmem:[#allocation14 + $0x18] sm:$0xf]
    %v311 = vld [vmem:[#allocation14 + $0x1c] sm:$0xf]
    %v312 = vld [vmem:[#allocation14 + $0x20] sm:$0xf]
    %v313 = vld [vmem:[#allocation14 + $0x24] sm:$0xf]
    %v314 = vld [vmem:[#allocation14 + $0x28] sm:$0xf]
    %v315 = vld [vmem:[#allocation14 + $0x2c] sm:$0xf]
    %v316 = vld [vmem:[#allocation14 + $0x30] sm:$0xf]
    %v317 = vld [vmem:[#allocation14 + $0x34] sm:$0xf]
    %v318 = vld [vmem:[#allocation14 + $0x38] sm:$0xf]
    %v319 = vld [vmem:[#allocation14 + $0x3c] sm:$0xf]
    %v336 = vunpack.c.l.b16 %v304
    %v337 = vunpack.c.l.b16 %v305
    %v338 = vunpack.c.l.b16 %v306
    %v339 = vunpack.c.l.b16 %v307
    %v340 = vunpack.c.l.b16 %v308
    %v341 = vunpack.c.l.b16 %v309
    %v342 = vunpack.c.l.b16 %v310
    %v343 = vunpack.c.l.b16 %v311
    %v344 = vunpack.c.l.b16 %v312
    %v345 = vunpack.c.l.b16 %v313
    %v346 = vunpack.c.l.b16 %v314
    %v347 = vunpack.c.l.b16 %v315
    %v348 = vunpack.c.l.b16 %v316
    %v349 = vunpack.c.l.b16 %v317
    %v350 = vunpack.c.l.b16 %v318
    %v351 = vunpack.c.l.b16 %v319
    %v352 = vpack.c.b16 %v337, %v336
    %v353 = vpack.c.b16 %v339, %v338
    %v354 = vpack.c.b16 %v341, %v340
    %v355 = vpack.c.b16 %v343, %v342
    %v356 = vpack.c.b16 %v345, %v344
    %v357 = vpack.c.b16 %v347, %v346
    %v358 = vpack.c.b16 %v349, %v348
    %v359 = vpack.c.b16 %v351, %v350
    %368 = vmatpush.bf16.msra.mxu0 %v359
    %369 = vmatpush.bf16.msra.mxu0 %v358
    %370 = vmatpush.bf16.msra.mxu0 %v357
    %371 = vmatpush.bf16.msra.mxu0 %v356
    %372 = vmatpush.bf16.msra.mxu0 %v355
    %373 = vmatpush.bf16.msra.mxu0 %v354
    %374 = vmatpush.bf16.msra.mxu0 %v353
    %375 = vmatpush.bf16.msra.mxu0 %v352
    %376 = vmatmul.bf16.gmra.mxu0 %v303
    %v377 = vpop.f32.mrf.mxu0
    %v378 = vadd.f32 0.0, %v377
    %v379 = vpop.f32.mrf.mxu0
    %380 = vdwg.mxu0
    %v381 = vadd.f32 %v302, %v378
    %v382 = vmul.f32 %v97, %v290
    %v383 = vmul.f32 %v100, %v293
    %v384 = vsub.f32 %v382, %v383
    %v385 = vadd.f32 %v384, %v381
    %v386 = vmul.f32 %v100, %v290
    %v387 = vmul.f32 %v97, %v293
    %v388 = vadd.f32 %v386, %v387
    %vm389 = vcmp.gt.f32.partialorder %v385, 1.0
    %v390 = vsel %vm389, 1, 0
    %v391 = vcvt.s32.f32 %v390
    %s392 = scalar_lea.vmem [#allocation7], 16
    %393 = vst [vmem:[%s392] sm:$0xff] %v391
    %v394 = vadd.f32 %v299, %v391
    %s395 = scalar_lea.vmem [#allocation11], 12
    %v396 = vld [vmem:[%s395] sm:$0xf]
    %v397 = vunpack.c.l.bf16 %v396
    %v398 = vpack.c.bf16 %v391, %v391
    %v399 = vld [vmem:[#allocation14] sm:$0xf]
    %v400 = vld [vmem:[#allocation14 + $0x4] sm:$0xf]
    %v401 = vld [vmem:[#allocation14 + $0x8] sm:$0xf]
    %v402 = vld [vmem:[#allocation14 + $0xc] sm:$0xf]
    %v403 = vld [vmem:[#allocation14 + $0x10] sm:$0xf]
    %v404 = vld [vmem:[#allocation14 + $0x14] sm:$0xf]
    %v405 = vld [vmem:[#allocation14 + $0x18] sm:$0xf]
    %v406 = vld [vmem:[#allocation14 + $0x1c] sm:$0xf]
    %v407 = vld [vmem:[#allocation14 + $0x20] sm:$0xf]
    %v408 = vld [vmem:[#allocation14 + $0x24] sm:$0xf]
    %v409 = vld [vmem:[#allocation14 + $0x28] sm:$0xf]
    %v410 = vld [vmem:[#allocation14 + $0x2c] sm:$0xf]
    %v411 = vld [vmem:[#allocation14 + $0x30] sm:$0xf]
    %v412 = vld [vmem:[#allocation14 + $0x34] sm:$0xf]
    %v413 = vld [vmem:[#allocation14 + $0x38] sm:$0xf]
    %v414 = vld [vmem:[#allocation14 + $0x3c] sm:$0xf]
    %v431 = vunpack.c.l.b16 %v399
    %v432 = vunpack.c.l.b16 %v400
    %v433 = vunpack.c.l.b16 %v401
    %v434 = vunpack.c.l.b16 %v402
    %v435 = vunpack.c.l.b16 %v403
    %v436 = vunpack.c.l.b16 %v404
    %v437 = vunpack.c.l.b16 %v405
    %v438 = vunpack.c.l.b16 %v406
    %v439 = vunpack.c.l.b16 %v407
    %v440 = vunpack.c.l.b16 %v408
    %v441 = vunpack.c.l.b16 %v409
    %v442 = vunpack.c.l.b16 %v410
    %v443 = vunpack.c.l.b16 %v411
    %v444 = vunpack.c.l.b16 %v412
    %v445 = vunpack.c.l.b16 %v413
    %v446 = vunpack.c.l.b16 %v414
    %v447 = vpack.c.b16 %v432, %v431
    %v448 = vpack.c.b16 %v434, %v433
    %v449 = vpack.c.b16 %v436, %v435
    %v450 = vpack.c.b16 %v438, %v437
    %v451 = vpack.c.b16 %v440, %v439
    %v452 = vpack.c.b16 %v442, %v441
    %v453 = vpack.c.b16 %v444, %v443
    %v454 = vpack.c.b16 %v446, %v445
    %463 = vmatpush.bf16.msra.mxu0 %v454
    %464 = vmatpush.bf16.msra.mxu0 %v453
    %465 = vmatpush.bf16.msra.mxu0 %v452
    %466 = vmatpush.bf16.msra.mxu0 %v451
    %467 = vmatpush.bf16.msra.mxu0 %v450
    %468 = vmatpush.bf16.msra.mxu0 %v449
    %469 = vmatpush.bf16.msra.mxu0 %v448
    %470 = vmatpush.bf16.msra.mxu0 %v447
    %471 = vmatmul.bf16.gmra.mxu0 %v398
    %v472 = vpop.f32.mrf.mxu0
    %v473 = vadd.f32 0.0, %v472
    %v474 = vpop.f32.mrf.mxu0
    %475 = vdwg.mxu0
    %v476 = vadd.f32 %v397, %v473
    %v477 = vmul.f32 %v97, %v385
    %v478 = vmul.f32 %v100, %v388
    %v479 = vsub.f32 %v477, %v478
    %v480 = vadd.f32 %v479, %v476
    %v481 = vmul.f32 %v100, %v385
    %v482 = vmul.f32 %v97, %v388
    %v483 = vadd.f32 %v481, %v482
    %vm484 = vcmp.gt.f32.partialorder %v480, 1.0
    %v485 = vsel %vm484, 1, 0
    %v486 = vcvt.s32.f32 %v485
    %s487 = scalar_lea.vmem [#allocation7], 24
    %488 = vst [vmem:[%s487] sm:$0xff] %v486
    %v489 = vadd.f32 %v394, %v486
    %s490 = scalar_lea.vmem [#allocation11], 16
    %v491 = vld [vmem:[%s490] sm:$0xf]
    %v492 = vunpack.c.l.bf16 %v491
    %v493 = vpack.c.bf16 %v486, %v486
    %v494 = vld [vmem:[#allocation14] sm:$0xf]
    %v495 = vld [vmem:[#allocation14 + $0x4] sm:$0xf]
    %v496 = vld [vmem:[#allocation14 + $0x8] sm:$0xf]
    %v497 = vld [vmem:[#allocation14 + $0xc] sm:$0xf]
    %v498 = vld [vmem:[#allocation14 + $0x10] sm:$0xf]
    %v499 = vld [vmem:[#allocation14 + $0x14] sm:$0xf]
    %v500 = vld [vmem:[#allocation14 + $0x18] sm:$0xf]
    %v501 = vld [vmem:[#allocation14 + $0x1c] sm:$0xf]
    %v502 = vld [vmem:[#allocation14 + $0x20] sm:$0xf]
    %v503 = vld [vmem:[#allocation14 + $0x24] sm:$0xf]
    %v504 = vld [vmem:[#allocation14 + $0x28] sm:$0xf]
    %v505 = vld [vmem:[#allocation14 + $0x2c] sm:$0xf]
    %v506 = vld [vmem:[#allocation14 + $0x30] sm:$0xf]
    %v507 = vld [vmem:[#allocation14 + $0x34] sm:$0xf]
    %v508 = vld [vmem:[#allocation14 + $0x38] sm:$0xf]
    %v509 = vld [vmem:[#allocation14 + $0x3c] sm:$0xf]
    %v526 = vunpack.c.l.b16 %v494
    %v527 = vunpack.c.l.b16 %v495
    %v528 = vunpack.c.l.b16 %v496
    %v529 = vunpack.c.l.b16 %v497
    %v530 = vunpack.c.l.b16 %v498
    %v531 = vunpack.c.l.b16 %v499
    %v532 = vunpack.c.l.b16 %v500
    %v533 = vunpack.c.l.b16 %v501
    %v534 = vunpack.c.l.b16 %v502
    %v535 = vunpack.c.l.b16 %v503
    %v536 = vunpack.c.l.b16 %v504
    %v537 = vunpack.c.l.b16 %v505
    %v538 = vunpack.c.l.b16 %v506
    %v539 = vunpack.c.l.b16 %v507
    %v540 = vunpack.c.l.b16 %v508
    %v541 = vunpack.c.l.b16 %v509
    %v542 = vpack.c.b16 %v527, %v526
    %v543 = vpack.c.b16 %v529, %v528
    %v544 = vpack.c.b16 %v531, %v530
    %v545 = vpack.c.b16 %v533, %v532
    %v546 = vpack.c.b16 %v535, %v534
    %v547 = vpack.c.b16 %v537, %v536
    %v548 = vpack.c.b16 %v539, %v538
    %v549 = vpack.c.b16 %v541, %v540
    %558 = vmatpush.bf16.msra.mxu0 %v549
    %559 = vmatpush.bf16.msra.mxu0 %v548
    %560 = vmatpush.bf16.msra.mxu0 %v547
    %561 = vmatpush.bf16.msra.mxu0 %v546
    %562 = vmatpush.bf16.msra.mxu0 %v545
    %563 = vmatpush.bf16.msra.mxu0 %v544
    %564 = vmatpush.bf16.msra.mxu0 %v543
    %565 = vmatpush.bf16.msra.mxu0 %v542
    %566 = vmatmul.bf16.gmra.mxu0 %v493
    %v567 = vpop.f32.mrf.mxu0
    %v568 = vadd.f32 0.0, %v567
    %v569 = vpop.f32.mrf.mxu0
    %570 = vdwg.mxu0
    %v571 = vadd.f32 %v492, %v568
    %v572 = vmul.f32 %v97, %v480
    %v573 = vmul.f32 %v100, %v483
    %v574 = vsub.f32 %v572, %v573
    %v575 = vadd.f32 %v574, %v571
    %v576 = vmul.f32 %v100, %v480
    %v577 = vmul.f32 %v97, %v483
    %v578 = vadd.f32 %v576, %v577
    %vm579 = vcmp.gt.f32.partialorder %v575, 1.0
    %v580 = vsel %vm579, 1, 0
    %v581 = vcvt.s32.f32 %v580
    %s582 = scalar_lea.vmem [#allocation7], 32
    %583 = vst [vmem:[%s582] sm:$0xff] %v581
    %v584 = vadd.f32 %v489, %v581
    %s585 = scalar_lea.vmem [#allocation11], 20
    %v586 = vld [vmem:[%s585] sm:$0xf]
    %v587 = vunpack.c.l.bf16 %v586
    %v588 = vpack.c.bf16 %v581, %v581
    %v589 = vld [vmem:[#allocation14] sm:$0xf]
    %v590 = vld [vmem:[#allocation14 + $0x4] sm:$0xf]
    %v591 = vld [vmem:[#allocation14 + $0x8] sm:$0xf]
    %v592 = vld [vmem:[#allocation14 + $0xc] sm:$0xf]
    %v593 = vld [vmem:[#allocation14 + $0x10] sm:$0xf]
    %v594 = vld [vmem:[#allocation14 + $0x14] sm:$0xf]
    %v595 = vld [vmem:[#allocation14 + $0x18] sm:$0xf]
    %v596 = vld [vmem:[#allocation14 + $0x1c] sm:$0xf]
    %v597 = vld [vmem:[#allocation14 + $0x20] sm:$0xf]
    %v598 = vld [vmem:[#allocation14 + $0x24] sm:$0xf]
    %v599 = vld [vmem:[#allocation14 + $0x28] sm:$0xf]
    %v600 = vld [vmem:[#allocation14 + $0x2c] sm:$0xf]
    %v601 = vld [vmem:[#allocation14 + $0x30] sm:$0xf]
    %v602 = vld [vmem:[#allocation14 + $0x34] sm:$0xf]
    %v603 = vld [vmem:[#allocation14 + $0x38] sm:$0xf]
    %v604 = vld [vmem:[#allocation14 + $0x3c] sm:$0xf]
    %v621 = vunpack.c.l.b16 %v589
    %v622 = vunpack.c.l.b16 %v590
    %v623 = vunpack.c.l.b16 %v591
    %v624 = vunpack.c.l.b16 %v592
    %v625 = vunpack.c.l.b16 %v593
    %v626 = vunpack.c.l.b16 %v594
    %v627 = vunpack.c.l.b16 %v595
    %v628 = vunpack.c.l.b16 %v596
    %v629 = vunpack.c.l.b16 %v597
    %v630 = vunpack.c.l.b16 %v598
    %v631 = vunpack.c.l.b16 %v599
    %v632 = vunpack.c.l.b16 %v600
    %v633 = vunpack.c.l.b16 %v601
    %v634 = vunpack.c.l.b16 %v602
    %v635 = vunpack.c.l.b16 %v603
    %v636 = vunpack.c.l.b16 %v604
    %v637 = vpack.c.b16 %v622, %v621
    %v638 = vpack.c.b16 %v624, %v623
    %v639 = vpack.c.b16 %v626, %v625
    %v640 = vpack.c.b16 %v628, %v627
    %v641 = vpack.c.b16 %v630, %v629
    %v642 = vpack.c.b16 %v632, %v631
    %v643 = vpack.c.b16 %v634, %v633
    %v644 = vpack.c.b16 %v636, %v635
    %653 = vmatpush.bf16.msra.mxu0 %v644
    %654 = vmatpush.bf16.msra.mxu0 %v643
    %655 = vmatpush.bf16.msra.mxu0 %v642
    %656 = vmatpush.bf16.msra.mxu0 %v641
    %657 = vmatpush.bf16.msra.mxu0 %v640
    %658 = vmatpush.bf16.msra.mxu0 %v639
    %659 = vmatpush.bf16.msra.mxu0 %v638
    %660 = vmatpush.bf16.msra.mxu0 %v637
    %661 = vmatmul.bf16.gmra.mxu0 %v588
    %v662 = vpop.f32.mrf.mxu0
    %v663 = vadd.f32 0.0, %v662
    %v664 = vpop.f32.mrf.mxu0
    %665 = vdwg.mxu0
    %v666 = vadd.f32 %v587, %v663
    %v667 = vmul.f32 %v97, %v575
    %v668 = vmul.f32 %v100, %v578
    %v669 = vsub.f32 %v667, %v668
    %v670 = vadd.f32 %v669, %v666
    %v671 = vmul.f32 %v100, %v575
    %v672 = vmul.f32 %v97, %v578
    %v673 = vadd.f32 %v671, %v672
    %vm674 = vcmp.gt.f32.partialorder %v670, 1.0
    %v675 = vsel %vm674, 1, 0
    %v676 = vcvt.s32.f32 %v675
    %s677 = scalar_lea.vmem [#allocation7], 40
    %678 = vst [vmem:[%s677] sm:$0xff] %v676
    %v679 = vadd.f32 %v584, %v676
    %s680 = scalar_lea.vmem [#allocation11], 24
    %v681 = vld [vmem:[%s680] sm:$0xf]
    %v682 = vunpack.c.l.bf16 %v681
    %v683 = vpack.c.bf16 %v676, %v676
    %v684 = vld [vmem:[#allocation14] sm:$0xf]
    %v685 = vld [vmem:[#allocation14 + $0x4] sm:$0xf]
    %v686 = vld [vmem:[#allocation14 + $0x8] sm:$0xf]
    %v687 = vld [vmem:[#allocation14 + $0xc] sm:$0xf]
    %v688 = vld [vmem:[#allocation14 + $0x10] sm:$0xf]
    %v689 = vld [vmem:[#allocation14 + $0x14] sm:$0xf]
    %v690 = vld [vmem:[#allocation14 + $0x18] sm:$0xf]
    %v691 = vld [vmem:[#allocation14 + $0x1c] sm:$0xf]
    %v692 = vld [vmem:[#allocation14 + $0x20] sm:$0xf]
    %v693 = vld [vmem:[#allocation14 + $0x24] sm:$0xf]
    %v694 = vld [vmem:[#allocation14 + $0x28] sm:$0xf]
    %v695 = vld [vmem:[#allocation14 + $0x2c] sm:$0xf]
    %v696 = vld [vmem:[#allocation14 + $0x30] sm:$0xf]
    %v697 = vld [vmem:[#allocation14 + $0x34] sm:$0xf]
    %v698 = vld [vmem:[#allocation14 + $0x38] sm:$0xf]
    %v699 = vld [vmem:[#allocation14 + $0x3c] sm:$0xf]
    %v716 = vunpack.c.l.b16 %v684
    %v717 = vunpack.c.l.b16 %v685
    %v718 = vunpack.c.l.b16 %v686
    %v719 = vunpack.c.l.b16 %v687
    %v720 = vunpack.c.l.b16 %v688
    %v721 = vunpack.c.l.b16 %v689
    %v722 = vunpack.c.l.b16 %v690
    %v723 = vunpack.c.l.b16 %v691
    %v724 = vunpack.c.l.b16 %v692
    %v725 = vunpack.c.l.b16 %v693
    %v726 = vunpack.c.l.b16 %v694
    %v727 = vunpack.c.l.b16 %v695
    %v728 = vunpack.c.l.b16 %v696
    %v729 = vunpack.c.l.b16 %v697
    %v730 = vunpack.c.l.b16 %v698
    %v731 = vunpack.c.l.b16 %v699
    %v732 = vpack.c.b16 %v717, %v716
    %v733 = vpack.c.b16 %v719, %v718
    %v734 = vpack.c.b16 %v721, %v720
    %v735 = vpack.c.b16 %v723, %v722
    %v736 = vpack.c.b16 %v725, %v724
    %v737 = vpack.c.b16 %v727, %v726
    %v738 = vpack.c.b16 %v729, %v728
    %v739 = vpack.c.b16 %v731, %v730
    %748 = vmatpush.bf16.msra.mxu0 %v739
    %749 = vmatpush.bf16.msra.mxu0 %v738
    %750 = vmatpush.bf16.msra.mxu0 %v737
    %751 = vmatpush.bf16.msra.mxu0 %v736
    %752 = vmatpush.bf16.msra.mxu0 %v735
    %753 = vmatpush.bf16.msra.mxu0 %v734
    %754 = vmatpush.bf16.msra.mxu0 %v733
    %755 = vmatpush.bf16.msra.mxu0 %v732
    %756 = vmatmul.bf16.gmra.mxu0 %v683
    %v757 = vpop.f32.mrf.mxu0
    %v758 = vadd.f32 0.0, %v757
    %v759 = vpop.f32.mrf.mxu0
    %760 = vdwg.mxu0
    %v761 = vadd.f32 %v682, %v758
    %v762 = vmul.f32 %v97, %v670
    %v763 = vmul.f32 %v100, %v673
    %v764 = vsub.f32 %v762, %v763
    %v765 = vadd.f32 %v764, %v761
    %v766 = vmul.f32 %v100, %v670
    %v767 = vmul.f32 %v97, %v673
    %v768 = vadd.f32 %v766, %v767
    %vm769 = vcmp.gt.f32.partialorder %v765, 1.0
    %v770 = vsel %vm769, 1, 0
    %v771 = vcvt.s32.f32 %v770
    %s772 = scalar_lea.vmem [#allocation7], 48
    %773 = vst [vmem:[%s772] sm:$0xff] %v771
    %v774 = vadd.f32 %v679, %v771
    %s775 = scalar_lea.vmem [#allocation11], 28
    %v776 = vld [vmem:[%s775] sm:$0xf]
    %v777 = vunpack.c.l.bf16 %v776
    %v778 = vpack.c.bf16 %v771, %v771
    %v779 = vld [vmem:[#allocation14] sm:$0xf]
    %v780 = vld [vmem:[#allocation14 + $0x4] sm:$0xf]
    %v781 = vld [vmem:[#allocation14 + $0x8] sm:$0xf]
    %v782 = vld [vmem:[#allocation14 + $0xc] sm:$0xf]
    %v783 = vld [vmem:[#allocation14 + $0x10] sm:$0xf]
    %v784 = vld [vmem:[#allocation14 + $0x14] sm:$0xf]
    %v785 = vld [vmem:[#allocation14 + $0x18] sm:$0xf]
    %v786 = vld [vmem:[#allocation14 + $0x1c] sm:$0xf]
    %v787 = vld [vmem:[#allocation14 + $0x20] sm:$0xf]
    %v788 = vld [vmem:[#allocation14 + $0x24] sm:$0xf]
    %v789 = vld [vmem:[#allocation14 + $0x28] sm:$0xf]
    %v790 = vld [vmem:[#allocation14 + $0x2c] sm:$0xf]
    %v791 = vld [vmem:[#allocation14 + $0x30] sm:$0xf]
    %v792 = vld [vmem:[#allocation14 + $0x34] sm:$0xf]
    %v793 = vld [vmem:[#allocation14 + $0x38] sm:$0xf]
    %v794 = vld [vmem:[#allocation14 + $0x3c] sm:$0xf]
    %v811 = vunpack.c.l.b16 %v779
    %v812 = vunpack.c.l.b16 %v780
    %v813 = vunpack.c.l.b16 %v781
    %v814 = vunpack.c.l.b16 %v782
    %v815 = vunpack.c.l.b16 %v783
    %v816 = vunpack.c.l.b16 %v784
    %v817 = vunpack.c.l.b16 %v785
    %v818 = vunpack.c.l.b16 %v786
    %v819 = vunpack.c.l.b16 %v787
    %v820 = vunpack.c.l.b16 %v788
    %v821 = vunpack.c.l.b16 %v789
    %v822 = vunpack.c.l.b16 %v790
    %v823 = vunpack.c.l.b16 %v791
    %v824 = vunpack.c.l.b16 %v792
    %v825 = vunpack.c.l.b16 %v793
    %v826 = vunpack.c.l.b16 %v794
    %v827 = vpack.c.b16 %v812, %v811
    %v828 = vpack.c.b16 %v814, %v813
    %v829 = vpack.c.b16 %v816, %v815
    %v830 = vpack.c.b16 %v818, %v817
    %v831 = vpack.c.b16 %v820, %v819
    %v832 = vpack.c.b16 %v822, %v821
    %v833 = vpack.c.b16 %v824, %v823
    %v834 = vpack.c.b16 %v826, %v825
    %843 = vmatpush.bf16.msra.mxu0 %v834
    %844 = vmatpush.bf16.msra.mxu0 %v833
    %845 = vmatpush.bf16.msra.mxu0 %v832
    %846 = vmatpush.bf16.msra.mxu0 %v831
    %847 = vmatpush.bf16.msra.mxu0 %v830
    %848 = vmatpush.bf16.msra.mxu0 %v829
    %849 = vmatpush.bf16.msra.mxu0 %v828
    %850 = vmatpush.bf16.msra.mxu0 %v827
    %851 = vmatmul.bf16.gmra.mxu0 %v778
    %v852 = vpop.f32.mrf.mxu0
    %v853 = vadd.f32 0.0, %v852
    %v854 = vpop.f32.mrf.mxu0
    %855 = vdwg.mxu0
    %v856 = vadd.f32 %v777, %v853
    %v857 = vmul.f32 %v97, %v765
    %v858 = vmul.f32 %v100, %v768
    %v859 = vsub.f32 %v857, %v858
    %v860 = vadd.f32 %v859, %v856
    %v861 = vmul.f32 %v100, %v765
    %v862 = vmul.f32 %v97, %v768
    %v863 = vadd.f32 %v861, %v862
    %vm864 = vcmp.gt.f32.partialorder %v860, 1.0
    %v865 = vsel %vm864, 1, 0
    %v866 = vcvt.s32.f32 %v865
    %s867 = scalar_lea.vmem [#allocation7], 56
    %868 = vst [vmem:[%s867] sm:$0xff] %v866
    %v869 = vadd.f32 %v774, %v866
    %v870 = vld [vmem:[#allocation7] sm:$0xff]
    %v871 = vld [vmem:[#allocation7 + $0x8] sm:$0xff]
    %v872 = vld [vmem:[#allocation7 + $0x10] sm:$0xff]
    %v873 = vld [vmem:[#allocation7 + $0x18] sm:$0xff]
    %v874 = vld [vmem:[#allocation7 + $0x20] sm:$0xff]
    %v875 = vld [vmem:[#allocation7 + $0x28] sm:$0xff]
    %v876 = vld [vmem:[#allocation7 + $0x30] sm:$0xff]
    %v877 = vld [vmem:[#allocation7 + $0x38] sm:$0xff]
    %v878 = vpack.c.bf16 %v871, %v870
    %v879 = vpack.c.bf16 %v873, %v872
    %v880 = vpack.c.bf16 %v875, %v874
    %v881 = vpack.c.bf16 %v877, %v876
    %v882 = vld [vmem:[#allocation16] sm:$0xf]
    %v883 = vld [vmem:[#allocation16 + $0x4] sm:$0xf]
    %v884 = vld [vmem:[#allocation16 + $0x8] sm:$0xf]
    %v885 = vld [vmem:[#allocation16 + $0xc] sm:$0xf]
    %v886 = vld [vmem:[#allocation16 + $0x10] sm:$0xf]
    %v887 = vld [vmem:[#allocation16 + $0x14] sm:$0xf]
    %v888 = vld [vmem:[#allocation16 + $0x18] sm:$0xf]
    %v889 = vld [vmem:[#allocation16 + $0x1c] sm:$0xf]
    %v890 = vld [vmem:[#allocation16 + $0x20] sm:$0xf]
    %v891 = vld [vmem:[#allocation16 + $0x24] sm:$0xf]
    %v892 = vld [vmem:[#allocation16 + $0x28] sm:$0xf]
    %v893 = vld [vmem:[#allocation16 + $0x2c] sm:$0xf]
    %v894 = vld [vmem:[#allocation16 + $0x30] sm:$0xf]
    %v895 = vld [vmem:[#allocation16 + $0x34] sm:$0xf]
    %v896 = vld [vmem:[#allocation16 + $0x38] sm:$0xf]
    %v897 = vld [vmem:[#allocation16 + $0x3c] sm:$0xf]
    %v914 = vunpack.c.l.b16 %v882
    %v915 = vunpack.c.l.b16 %v883
    %v916 = vunpack.c.l.b16 %v884
    %v917 = vunpack.c.l.b16 %v885
    %v918 = vunpack.c.l.b16 %v886
    %v919 = vunpack.c.l.b16 %v887
    %v920 = vunpack.c.l.b16 %v888
    %v921 = vunpack.c.l.b16 %v889
    %v922 = vunpack.c.l.b16 %v890
    %v923 = vunpack.c.l.b16 %v891
    %v924 = vunpack.c.l.b16 %v892
    %v925 = vunpack.c.l.b16 %v893
    %v926 = vunpack.c.l.b16 %v894
    %v927 = vunpack.c.l.b16 %v895
    %v928 = vunpack.c.l.b16 %v896
    %v929 = vunpack.c.l.b16 %v897
    %v930 = vpack.c.b16 %v915, %v914
    %v931 = vpack.c.b16 %v917, %v916
    %v932 = vpack.c.b16 %v919, %v918
    %v933 = vpack.c.b16 %v921, %v920
    %v934 = vpack.c.b16 %v923, %v922
    %v935 = vpack.c.b16 %v925, %v924
    %v936 = vpack.c.b16 %v927, %v926
    %v937 = vpack.c.b16 %v929, %v928
    %946 = vmatpush.bf16.msra.mxu0 %v937
    %947 = vmatpush.bf16.msra.mxu0 %v936
    %948 = vmatpush.bf16.msra.mxu0 %v935
    %949 = vmatpush.bf16.msra.mxu0 %v934
    %950 = vmatpush.bf16.msra.mxu0 %v933
    %951 = vmatpush.bf16.msra.mxu0 %v932
    %952 = vmatpush.bf16.msra.mxu0 %v931
    %953 = vmatpush.bf16.msra.mxu0 %v930
    %954 = vmatmul.bf16.gmra.mxu0 %v878
    %v955 = vpop.f32.mrf.mxu0
    %v956 = vadd.f32 0.0, %v955
    %v957 = vpop.f32.mrf.mxu0
    %v958 = vadd.f32 0.0, %v957
    %959 = vmatmul.bf16.gmra.mxu0 %v879
    %v960 = vpop.f32.mrf.mxu0
    %v961 = vadd.f32 0.0, %v960
    %v962 = vpop.f32.mrf.mxu0
    %v963 = vadd.f32 0.0, %v962
    %964 = vmatmul.bf16.gmra.mxu0 %v880
    %v965 = vpop.f32.mrf.mxu0
    %v966 = vadd.f32 0.0, %v965
    %v967 = vpop.f32.mrf.mxu0
    %v968 = vadd.f32 0.0, %v967
    %969 = vmatmul.bf16.gmra.mxu0 %v881
    %v970 = vpop.f32.mrf.mxu0
    %v971 = vadd.f32 0.0, %v970
    %v972 = vpop.f32.mrf.mxu0
    %v973 = vadd.f32 0.0, %v972
    %974 = vdwg.mxu0
    %975 = vst [vmem:[#allocation8] sm:$0xff] %v956
    %976 = vst [vmem:[#allocation8 + $0x8] sm:$0xff] %v958
    %977 = vst [vmem:[#allocation8 + $0x10] sm:$0xff] %v961
    %978 = vst [vmem:[#allocation8 + $0x18] sm:$0xff] %v963
    %979 = vst [vmem:[#allocation8 + $0x20] sm:$0xff] %v966
    %980 = vst [vmem:[#allocation8 + $0x28] sm:$0xff] %v968
    %981 = vst [vmem:[#allocation8 + $0x30] sm:$0xff] %v971
    %982 = vst [vmem:[#allocation8 + $0x38] sm:$0xff] %v973
    %v983 = vld [vmem:[#allocation5] sm:$0xff]
    %v984 = vmul.f32 %v103, %v983
    %v985 = vld [vmem:[#allocation8] sm:$0xff]
    %v986 = vmul.f32 %v106, %v985
    %v987 = vadd.f32 %v984, %v986
    %988 = vst [vmem:[#allocation17] sm:$0xff] %v987
    %v989 = vmul.f32 %v103, %v987
    %s990 = scalar_lea.vmem [#allocation8], 8
    %v991 = vld [vmem:[%s990] sm:$0xff]
    %v992 = vmul.f32 %v106, %v991
    %v993 = vadd.f32 %v989, %v992
    %s994 = scalar_lea.vmem [#allocation17], 8
    %995 = vst [vmem:[%s994] sm:$0xff] %v993
    %v996 = vmul.f32 %v103, %v993
    %s997 = scalar_lea.vmem [#allocation8], 16
    %v998 = vld [vmem:[%s997] sm:$0xff]
    %v999 = vmul.f32 %v106, %v998
    %v1000 = vadd.f32 %v996, %v999
    %s1001 = scalar_lea.vmem [#allocation17], 16
    %1002 = vst [vmem:[%s1001] sm:$0xff] %v1000
    %v1003 = vmul.f32 %v103, %v1000
    %s1004 = scalar_lea.vmem [#allocation8], 24
    %v1005 = vld [vmem:[%s1004] sm:$0xff]
    %v1006 = vmul.f32 %v106, %v1005
    %v1007 = vadd.f32 %v1003, %v1006
    %s1008 = scalar_lea.vmem [#allocation17], 24
    %1009 = vst [vmem:[%s1008] sm:$0xff] %v1007
    %v1010 = vmul.f32 %v103, %v1007
    %s1011 = scalar_lea.vmem [#allocation8], 32
    %v1012 = vld [vmem:[%s1011] sm:$0xff]
    %v1013 = vmul.f32 %v106, %v1012
    %v1014 = vadd.f32 %v1010, %v1013
    %s1015 = scalar_lea.vmem [#allocation17], 32
    %1016 = vst [vmem:[%s1015] sm:$0xff] %v1014
    %v1017 = vmul.f32 %v103, %v1014
    %s1018 = scalar_lea.vmem [#allocation8], 40
    %v1019 = vld [vmem:[%s1018] sm:$0xff]
    %v1020 = vmul.f32 %v106, %v1019
    %v1021 = vadd.f32 %v1017, %v1020
    %s1022 = scalar_lea.vmem [#allocation17], 40
    %1023 = vst [vmem:[%s1022] sm:$0xff] %v1021
    %v1024 = vmul.f32 %v103, %v1021
    %s1025 = scalar_lea.vmem [#allocation8], 48
    %v1026 = vld [vmem:[%s1025] sm:$0xff]
    %v1027 = vmul.f32 %v106, %v1026
    %v1028 = vadd.f32 %v1024, %v1027
    %s1029 = scalar_lea.vmem [#allocation17], 48
    %1030 = vst [vmem:[%s1029] sm:$0xff] %v1028
    %v1031 = vmul.f32 %v103, %v1028
    %s1032 = scalar_lea.vmem [#allocation8], 56
    %v1033 = vld [vmem:[%s1032] sm:$0xff]
    %v1034 = vmul.f32 %v106, %v1033
    %v1035 = vadd.f32 %v1031, %v1034
    %s1036 = scalar_lea.vmem [#allocation17], 56
    %1037 = vst [vmem:[%s1036] sm:$0xff] %v1035
    %1038 = vst [vmem:[#allocation2] sm:$0xff] %v866
    %1039 = vst [vmem:[#allocation3] sm:$0xff] %v860
    %1040 = vst [vmem:[#allocation4] sm:$0xff] %v863
    %1041 = vst [vmem:[#allocation5] sm:$0xff] %v1035
    %1042 = vst [vmem:[#allocation6] sm:$0xff] %v869
    // Predicated region
    $region46: #{tpu_custom_call.1} parent=1 // pred_check
      %p1043 = pneg %p83
    $region47: #{tpu_custom_call.1} parent=1 // pred_check_branch
      %1045 = sbr.rel (%p1043) target = $region49
    $region48: #{tpu_custom_call.1} parent=1 // pred_region
      %1046 = vst [vmem:[#allocation18] sm:$0xff] %v866
      %1047 = vst [vmem:[#allocation20] sm:$0xff] %v860
      %1048 = vst [vmem:[#allocation21] sm:$0xff] %v1035
      %1049 = vst [vmem:[#allocation23] sm:$0xff] %v869
    $region49: #{tpu_custom_call.1} parent=1 // pred_fallthru
      _
    // Predicated region
    $region50: #{tpu_custom_call.1} parent=1 // pred_check
      _
    $region51: #{tpu_custom_call.1} parent=1 // pred_check_branch
      %1051 = sbr.rel (0) target = $region53
    $region52: #{tpu_custom_call.1} parent=1 // pred_region
      %1053 = vsyncadd [#allocation13], 0
      %s1054 = sshll.u32 [#allocation17], 4
      %s1055 = int_to_ptr.vmem [resolvable:$true] %s1054
      %s1056 = sshll.u32 %s8, 4
      %s1057 = int_to_ptr.hbm [resolvable:$true] %s1056
      %1062 = dma.vmem_to_hbm [thread:$0]  %s1055, 1024, %s1057, [#allocation13], 128, 128, 8
    $region53: #{tpu_custom_call.1} parent=1 // pred_fallthru
      _
    // Predicated region
    $region54: #{tpu_custom_call.1} parent=1 // pred_check
      _
    $region55: #{tpu_custom_call.1} parent=1 // pred_check_branch
      %1064 = sbr.rel (0) target = $region57
    $region56: #{tpu_custom_call.1} parent=1 // pred_region
      %1066 = vsyncadd [#allocation19], 0
      %s1068 = sshll.u32 [#allocation18], 4
      %s1069 = int_to_ptr.vmem [resolvable:$true] %s1068
      %s1070 = sshll.u32 %s9, 4
      %s1071 = int_to_ptr.hbm [resolvable:$true] %s1070
      %1073 = dma.vmem_to_hbm [thread:$0]  %s1069, 128, %s1071, [#allocation19]
    $region57: #{tpu_custom_call.1} parent=1 // pred_fallthru
      _
    // Predicated region
    $region58: #{tpu_custom_call.1} parent=1 // pred_check
      _
    $region59: #{tpu_custom_call.1} parent=1 // pred_check_branch
      %1075 = sbr.rel (0) target = $region61
    $region60: #{tpu_custom_call.1} parent=1 // pred_region
      %1077 = vsyncadd [#allocation19], 0
      %s1079 = sshll.u32 [#allocation20], 4
      %s1080 = int_to_ptr.vmem [resolvable:$true] %s1079
      %s1081 = sshll.u32 %s10, 4
      %s1082 = int_to_ptr.hbm [resolvable:$true] %s1081
      %1084 = dma.vmem_to_hbm [thread:$0]  %s1080, 128, %s1082, [#allocation19]
    $region61: #{tpu_custom_call.1} parent=1 // pred_fallthru
      _
    // Predicated region
    $region62: #{tpu_custom_call.1} parent=1 // pred_check
      _
    $region63: #{tpu_custom_call.1} parent=1 // pred_check_branch
      %1086 = sbr.rel (0) target = $region65
    $region64: #{tpu_custom_call.1} parent=1 // pred_region
      %1088 = vsyncadd [#allocation22], 0
      %s1090 = sshll.u32 [#allocation21], 4
      %s1091 = int_to_ptr.vmem [resolvable:$true] %s1090
      %s1092 = sshll.u32 %s11, 4
      %s1093 = int_to_ptr.hbm [resolvable:$true] %s1092
      %1095 = dma.vmem_to_hbm [thread:$0]  %s1091, 128, %s1093, [#allocation22]
    $region65: #{tpu_custom_call.1} parent=1 // pred_fallthru
      _
    // Predicated region
    $region66: #{tpu_custom_call.1} parent=1 // pred_check
      _
    $region67: #{tpu_custom_call.1} parent=1 // pred_check_branch
      %1097 = sbr.rel (0) target = $region69
    $region68: #{tpu_custom_call.1} parent=1 // pred_region
      %1099 = vsyncadd [#allocation22], 0
      %s1101 = sshll.u32 [#allocation23], 4
      %s1102 = int_to_ptr.vmem [resolvable:$true] %s1101
      %s1103 = sshll.u32 %s12, 4
      %s1104 = int_to_ptr.hbm [resolvable:$true] %s1103
      %1106 = dma.vmem_to_hbm [thread:$0]  %s1102, 128, %s1104, [#allocation22]
    $region69: #{tpu_custom_call.1} parent=1 // pred_fallthru
      _
    // Predicated region
    $region70: #{tpu_custom_call.1} parent=1 // pred_check
      _
    $region71: #{tpu_custom_call.1} parent=1 // pred_check_branch
      %1108 = sbr.rel (0) target = $region73
    $region72: #{tpu_custom_call.1} parent=1 // pred_region
      %1110 = dma.done [#allocation13], 1024
    $region73: #{tpu_custom_call.1} parent=1 // pred_fallthru
      _
    // Predicated region
    $region74: #{tpu_custom_call.1} parent=1 // pred_check
      _
    $region75: #{tpu_custom_call.1} parent=1 // pred_check_branch
      %1112 = sbr.rel (0) target = $region77
    $region76: #{tpu_custom_call.1} parent=1 // pred_region
      %1114 = dma.done [#allocation19], 128
    $region77: #{tpu_custom_call.1} parent=1 // pred_fallthru
      _
    // Predicated region
    $region78: #{tpu_custom_call.1} parent=1 // pred_check
      _
    $region79: #{tpu_custom_call.1} parent=1 // pred_check_branch
      %1116 = sbr.rel (0) target = $region81
    $region80: #{tpu_custom_call.1} parent=1 // pred_region
      %1118 = dma.done [#allocation19], 128
    $region81: #{tpu_custom_call.1} parent=1 // pred_fallthru
      _
    // Predicated region
    $region82: #{tpu_custom_call.1} parent=1 // pred_check
      _
    $region83: #{tpu_custom_call.1} parent=1 // pred_check_branch
      %1120 = sbr.rel (0) target = $region85
    $region84: #{tpu_custom_call.1} parent=1 // pred_region
      %1122 = dma.done [#allocation22], 128
    $region85: #{tpu_custom_call.1} parent=1 // pred_fallthru
      _
    // Predicated region
    $region86: #{tpu_custom_call.1} parent=1 // pred_check
      _
    $region87: #{tpu_custom_call.1} parent=1 // pred_check_branch
      %1124 = sbr.rel (0) target = $region89
    $region88: #{tpu_custom_call.1} parent=1 // pred_region
      %1126 = dma.done [#allocation22], 128
    $region89: #{tpu_custom_call.1} parent=1 // pred_fallthru
      _
    %1127 = vsyncpa [#allocation12], 1
    %1128 = vsyncpa [#allocation15], 1
    %1129 = vsyncpa [#allocation13], 1
    %1130 = vsyncpa [#allocation19], 1
    %1131 = vsyncpa [#allocation22], 1

</llo_original>
